<compile_context>
chip_gen: v5e
topology: v5e:2x2
jax: 0.10.0
libtpu: 0.0.40
codegen_flags: <defaults>
</compile_context>

<pallas_src>
import math
import jax
import jax.numpy as jnp
from jax.experimental import pallas as pl
from jax.experimental.pallas import tpu as pltpu


def _layer_norm(x, g, b, eps=1e-5):
    mu = jnp.mean(x, axis=-1, keepdims=True)
    xc = x - mu
    var = jnp.mean(xc * xc, axis=-1, keepdims=True)
    return xc * jax.lax.rsqrt(var + eps) * g + b


def make_decoder_kernel(n_heads, head_dim, seq_len):
    scale = 1.0 / math.sqrt(head_dim)
    Hhd = n_heads * head_dim
    T = seq_len

    def kernel(x_ref,
               wqkv_ref, bqkv_ref, wo_ref, bo_ref,
               ln1g_ref, ln1b_ref, ln2g_ref, ln2b_ref,
               w1_ref, b1_ref, w2_ref, b2_ref,
               lnfg_ref, lnfb_ref,
               h_out_ref, x_acc):
        l = pl.program_id(1)

        # Initialize the residual-stream accumulator at the first layer.
        @pl.when(l == 0)
        def _():
            x_acc[...] = x_ref[...]

        # Additive causal bias (one iota+select per grid step; folded into the
        # score add instead of a per-head mask/select).
        row = jax.lax.broadcasted_iota(jnp.int32, (T, T), 0)
        col = jax.lax.broadcasted_iota(jnp.int32, (T, T), 1)
        neg_bias = jnp.where(row >= col, 0.0, -1e30).astype(jnp.float32)

        x = x_acc[...]                                           # (T, D) f32

        # ---- causal multi-head self-attention (pre-LN) ----
        xn = _layer_norm(x, ln1g_ref[...], ln1b_ref[...])
        # Fused QKV projection: (T, D) x (D, 3*H*hd), bf16 in / f32 acc.
        qkv = jnp.dot(xn.astype(jnp.bfloat16), wqkv_ref[...],
                      preferred_element_type=jnp.float32) + bqkv_ref[...]
        qkv_b = qkv.astype(jnp.bfloat16)

        heads = []
        for h in range(n_heads):
            lo = h * head_dim
            qh = qkv_b[:, lo:lo + head_dim]                      # (T, hd)
            kh = qkv_b[:, Hhd + lo:Hhd + lo + head_dim]
            vh = qkv_b[:, 2 * Hhd + lo:2 * Hhd + lo + head_dim]
            # q @ k^T without materializing a transpose.
            s = jax.lax.dot_general(qh, kh, (((1,), (1,)), ((), ())),
                                    preferred_element_type=jnp.float32)
            s = s * scale + neg_bias
            s = s - jnp.max(s, axis=-1, keepdims=True)
            p = jnp.exp(s)
            p = p * pl.reciprocal(jnp.sum(p, axis=-1, keepdims=True),
                                  approx=True)
            heads.append(jnp.dot(p.astype(jnp.bfloat16), vh,
                                 preferred_element_type=jnp.float32))
        o = jnp.concatenate(heads, axis=-1)                      # (T, H*hd)
        # Single fused output projection: (T, H*hd) x (H*hd, D).
        attn = jnp.dot(o.astype(jnp.bfloat16), wo_ref[...],
                       preferred_element_type=jnp.float32) + bo_ref[...]
        x = x + attn

        # ---- MLP (pre-LN) ----
        xn = _layer_norm(x, ln2g_ref[...], ln2b_ref[...])
        hdn = jnp.dot(xn.astype(jnp.bfloat16), w1_ref[...],
                      preferred_element_type=jnp.float32) + b1_ref[...]
        # TODO(synk): PyTorch nn.GELU default is the exact erf form; using the
        # tanh approximation here for robust Mosaic lowering.
        hdn = 0.5 * hdn * (1.0 + jnp.tanh(
            0.7978845608028654 * (hdn + 0.044715 * hdn * hdn * hdn)))
        x = x + jnp.dot(hdn.astype(jnp.bfloat16), w2_ref[...],
                        preferred_element_type=jnp.float32) + b2_ref[...]

        x_acc[...] = x

        # ---- final LayerNorm after the last layer ----
        @pl.when(l == pl.num_programs(1) - 1)
        def _():
            h_out_ref[...] = _layer_norm(x_acc[...], lnfg_ref[...],
                                         lnfb_ref[...])

    return kernel


def head_kernel(h_ref, wh_ref, bh_ref, out_ref):
    out_ref[...] = (jnp.dot(h_ref[...].astype(jnp.bfloat16), wh_ref[...],
                            preferred_element_type=jnp.float32)
                    + bh_ref[...])


def _pick_vocab_tile(V):
    if V % 128 != 0:
        return V
    for cand in (2048, 1024, 512, 256, 128):
        if V % cand == 0:
            return cand
    return V


def gpt_forward(idx, params, config):
    B, T = idx.shape
    D = config['embed_dim']
    V = config['n_vocab']
    L = config['n_layers']
    H = config['n_heads']
    hd = config['head_dim']
    Fh = config['mlp_dim']
    Hhd = H * hd

    # Glue kept in plain JAX: embedding gather + positional add (dropout = id).
    tok = jnp.take(params['tok_embed'], idx, axis=0)     # (B, T, D); row 0 = 0
    x = (tok + params['pos_embed'][:, :T, :]).astype(jnp.float32)

    bf16 = lambda a: a.astype(jnp.bfloat16)

    # ---------------- decoder: grid = (batch, layer) ----------------
    dec_kernel = make_decoder_kernel(H, hd, T)

    hidden = pl.pallas_call(
        dec_kernel,
        out_shape=jax.ShapeDtypeStruct((B, T, D), jnp.float32),
        grid=(B, L),
        in_specs=[
            pl.BlockSpec((pl.Squeezed(), T, D), lambda b, l: (b, 0, 0)),       # x
            pl.BlockSpec((pl.Squeezed(), D, 3 * Hhd), lambda b, l: (l, 0, 0)),  # wqkv
            pl.BlockSpec((pl.Squeezed(), 1, 3 * Hhd), lambda b, l: (l, 0, 0)),  # bqkv
            pl.BlockSpec((pl.Squeezed(), Hhd, D), lambda b, l: (l, 0, 0)),      # wo
            pl.BlockSpec((pl.Squeezed(), 1, D), lambda b, l: (l, 0, 0)),        # bo
            pl.BlockSpec((pl.Squeezed(), 1, D), lambda b, l: (l, 0, 0)),        # ln1g
            pl.BlockSpec((pl.Squeezed(), 1, D), lambda b, l: (l, 0, 0)),        # ln1b
            pl.BlockSpec((pl.Squeezed(), 1, D), lambda b, l: (l, 0, 0)),        # ln2g
            pl.BlockSpec((pl.Squeezed(), 1, D), lambda b, l: (l, 0, 0)),        # ln2b
            pl.BlockSpec((pl.Squeezed(), D, Fh), lambda b, l: (l, 0, 0)),       # w1
            pl.BlockSpec((pl.Squeezed(), 1, Fh), lambda b, l: (l, 0, 0)),       # b1
            pl.BlockSpec((pl.Squeezed(), Fh, D), lambda b, l: (l, 0, 0)),       # w2
            pl.BlockSpec((pl.Squeezed(), 1, D), lambda b, l: (l, 0, 0)),        # b2
            pl.BlockSpec((1, D), lambda b, l: (0, 0)),                          # lnfg
            pl.BlockSpec((1, D), lambda b, l: (0, 0)),                          # lnfb
        ],
        out_specs=pl.BlockSpec((pl.Squeezed(), T, D), lambda b, l: (b, 0, 0)),
        scratch_shapes=[pltpu.VMEM((T, D), jnp.float32)],
        compiler_params=pltpu.CompilerParams(
            dimension_semantics=("parallel", "arbitrary")),
    )(x,
      bf16(params['wqkv']), params['bqkv'],
      bf16(params['wo']), params['bo'],
      params['ln1g'], params['ln1b'], params['ln2g'], params['ln2b'],
      bf16(params['w1']), params['b1'],
      bf16(params['w2']), params['b2'],
      params['lnfg'], params['lnfb'])

    # ---------------- vocab head: grid = (batch, vocab tile) ----------------
    Vt = _pick_vocab_tile(V)
    logits = pl.pallas_call(
        head_kernel,
        out_shape=jax.ShapeDtypeStruct((B, T, V), jnp.float32),
        grid=(B, V // Vt),
        in_specs=[
            pl.BlockSpec((pl.Squeezed(), T, D), lambda b, j: (b, 0, 0)),
            pl.BlockSpec((D, Vt), lambda b, j: (0, j)),
            pl.BlockSpec((1, Vt), lambda b, j: (0, j)),
        ],
        out_specs=pl.BlockSpec((pl.Squeezed(), T, Vt), lambda b, j: (b, 0, j)),
        compiler_params=pltpu.CompilerParams(
            dimension_semantics=("parallel", "parallel")),
    )(hidden, bf16(params['wh']), params['bh'])
    return logits


def init_params(key, config):
    D = config['embed_dim']
    V = config['n_vocab']
    T = config['seq_len']
    L = config['n_layers']
    H = config['n_heads']
    hd = config['head_dim']
    Fh = config['mlp_dim']
    Hhd = H * hd

    ks = jax.random.split(key, 8)

    def rnd(k, shape, std=0.02):
        return (std * jax.random.normal(k, shape)).astype(jnp.float32)

    tok_embed = jax.random.normal(ks[0], (V, D)).astype(jnp.float32)
    tok_embed = tok_embed.at[0].set(0.0)                 # padding_idx=0 -> zero row

    return dict(
        tok_embed=tok_embed,
        pos_embed=jnp.zeros((1, T, D), jnp.float32),     # matches torch.zeros init
        # Fused, lane-dense weight layouts.
        wqkv=rnd(ks[1], (L, D, 3 * Hhd)),
        bqkv=jnp.zeros((L, 1, 3 * Hhd), jnp.float32),
        wo=rnd(ks[2], (L, Hhd, D)),
        bo=jnp.zeros((L, 1, D), jnp.float32),
        ln1g=jnp.ones((L, 1, D), jnp.float32), ln1b=jnp.zeros((L, 1, D), jnp.float32),
        ln2g=jnp.ones((L, 1, D), jnp.float32), ln2b=jnp.zeros((L, 1, D), jnp.float32),
        w1=rnd(ks[3], (L, D, Fh)), b1=jnp.zeros((L, 1, Fh), jnp.float32),
        w2=rnd(ks[4], (L, Fh, D)), b2=jnp.zeros((L, 1, D), jnp.float32),
        lnfg=jnp.ones((1, D), jnp.float32), lnfb=jnp.zeros((1, D), jnp.float32),
        wh=rnd(ks[5], (D, V)), bh=jnp.zeros((1, V), jnp.float32),
    )


if __name__ == "__main__":
    config = dict(n_vocab=64, embed_dim=32, seq_len=8,
                  n_layers=2, n_heads=4, head_dim=8, mlp_dim=128, drop=0.0)

    key = jax.random.PRNGKey(0)
    pkey, ikey = jax.random.split(key)
    params = init_params(pkey, config)

    idx = jax.random.randint(ikey, (2, config['seq_len']), 0, config['n_vocab'],
                             dtype=jnp.int32)

    logits = gpt_forward(idx, params, config)
    jax.block_until_ready(logits)
    assert logits.shape == (2, config['seq_len'], config['n_vocab'])
    assert logits.dtype == jnp.float32
    print("KERNEL_OK")
</pallas_src>

<mosaic_0001>
module attributes {stable_mosaic.version = 11 : i64} {
  func.func @kernel(%arg0: i32, %arg1: i32, %arg2: memref<1x8x32xf32, #tpu.memory_space<vmem>>, %arg3: memref<1x32x96xbf16, #tpu.memory_space<vmem>>, %arg4: memref<1x1x96xf32, #tpu.memory_space<vmem>>, %arg5: memref<1x32x32xbf16, #tpu.memory_space<vmem>>, %arg6: memref<1x1x32xf32, #tpu.memory_space<vmem>>, %arg7: memref<1x1x32xf32, #tpu.memory_space<vmem>>, %arg8: memref<1x1x32xf32, #tpu.memory_space<vmem>>, %arg9: memref<1x1x32xf32, #tpu.memory_space<vmem>>, %arg10: memref<1x1x32xf32, #tpu.memory_space<vmem>>, %arg11: memref<1x32x128xbf16, #tpu.memory_space<vmem>>, %arg12: memref<1x1x128xf32, #tpu.memory_space<vmem>>, %arg13: memref<1x128x32xbf16, #tpu.memory_space<vmem>>, %arg14: memref<1x1x32xf32, #tpu.memory_space<vmem>>, %arg15: memref<1x32xf32, #tpu.memory_space<vmem>>, %arg16: memref<1x32xf32, #tpu.memory_space<vmem>>, %arg17: memref<1x8x32xf32, #tpu.memory_space<vmem>>, %arg18: memref<8x32xf32, #tpu.memory_space<vmem>>) attributes {dimension_semantics = [#tpu.dimension_semantics<parallel>, #tpu.dimension_semantics<arbitrary>], iteration_bounds = array<i64: 2, 2>, scalar_prefetch = 0 : i64, scratch_operands = 1 : i64, tpu.core_type = #tpu.core_type<tc>, window_params = [{transform_indices = @transform_0, window_bounds = array<i64: 1, 8, 32>}, {transform_indices = @transform_1, window_bounds = array<i64: 1, 32, 96>}, {transform_indices = @transform_2, window_bounds = array<i64: 1, 1, 96>}, {transform_indices = @transform_3, window_bounds = array<i64: 1, 32, 32>}, {transform_indices = @transform_4, window_bounds = array<i64: 1, 1, 32>}, {transform_indices = @transform_5, window_bounds = array<i64: 1, 1, 32>}, {transform_indices = @transform_6, window_bounds = array<i64: 1, 1, 32>}, {transform_indices = @transform_7, window_bounds = array<i64: 1, 1, 32>}, {transform_indices = @transform_8, window_bounds = array<i64: 1, 1, 32>}, {transform_indices = @transform_9, window_bounds = array<i64: 1, 32, 128>}, {transform_indices = @transform_10, window_bounds = array<i64: 1, 1, 128>}, {transform_indices = @transform_11, window_bounds = array<i64: 1, 128, 32>}, {transform_indices = @transform_12, window_bounds = array<i64: 1, 1, 32>}, {pipeline_mode = #tpu.pipeline_mode<synchronous>, transform_indices = @transform_13, window_bounds = array<i64: 1, 32>}, {pipeline_mode = #tpu.pipeline_mode<synchronous>, transform_indices = @transform_14, window_bounds = array<i64: 1, 32>}, {transform_indices = @transform_15, window_bounds = array<i64: 1, 8, 32>}]} {
    %c0_i32 = arith.constant 0 : i32
    %0 = arith.cmpi eq, %arg1, %c0_i32 : i32
    %1 = arith.extui %0 : i1 to i32
    %c0_i32_0 = arith.constant 0 : i32
    %2 = arith.cmpi ne, %1, %c0_i32_0 : i32
    scf.if %2 {
      %c0_80 = arith.constant 0 : index
      %c0_81 = arith.constant 0 : index
      %c0_82 = arith.constant 0 : index
      %187 = vector.load %arg2[%c0_80, %c0_81, %c0_82] : memref<1x8x32xf32, #tpu.memory_space<vmem>>, vector<1x8x32xf32>
      %188 = vector.shape_cast %187 : vector<1x8x32xf32> to vector<8x32xf32>
      %c0_83 = arith.constant 0 : index
      %c0_84 = arith.constant 0 : index
      %189 = vector.load %arg18[%c0_83, %c0_84] : memref<8x32xf32, #tpu.memory_space<vmem>>, vector<8x32xf32>
      tpu.vector_store %arg18[%c0_83, %c0_84], %188 {strides = array<i32>} : memref<8x32xf32, #tpu.memory_space<vmem>>, vector<8x32xf32>,
    } else {
    }
    %3 = tpu.iota {dimensions = array<i32: 0>} : vector<8x8xi32>
    %4 = tpu.iota {dimensions = array<i32: 1>} : vector<8x8xi32>
    %5 = arith.cmpi sge, %3, %4 : vector<8x8xi32>
    %cst = arith.constant 0.000000e+00 : f32
    %cst_1 = arith.constant -1.000000e+30 : f32
    %6 = vector.broadcast %cst : f32 to vector<8x8xf32>
    %7 = vector.broadcast %cst_1 : f32 to vector<8x8xf32>
    %8 = arith.select %5, %6, %7 : vector<8x8xi1>, vector<8x8xf32>
    %c0 = arith.constant 0 : index
    %c0_2 = arith.constant 0 : index
    %9 = vector.load %arg18[%c0, %c0_2] : memref<8x32xf32, #tpu.memory_space<vmem>>, vector<8x32xf32>
    %c0_3 = arith.constant 0 : index
    %c0_4 = arith.constant 0 : index
    %c0_5 = arith.constant 0 : index
    %10 = vector.load %arg7[%c0_3, %c0_4, %c0_5] : memref<1x1x32xf32, #tpu.memory_space<vmem>>, vector<1x1x32xf32>
    %11 = vector.shape_cast %10 : vector<1x1x32xf32> to vector<1x32xf32>
    %c0_6 = arith.constant 0 : index
    %c0_7 = arith.constant 0 : index
    %c0_8 = arith.constant 0 : index
    %12 = vector.load %arg8[%c0_6, %c0_7, %c0_8] : memref<1x1x32xf32, #tpu.memory_space<vmem>>, vector<1x1x32xf32>
    %13 = vector.shape_cast %12 : vector<1x1x32xf32> to vector<1x32xf32>
    %cst_9 = arith.constant dense<0.000000e+00> : vector<8xf32>
    %14 = vector.multi_reduction <add>, %9, %cst_9 [1] : vector<8x32xf32> to vector<8xf32>
    %15 = vector.shape_cast %14 : vector<8xf32> to vector<8x1xf32>
    %cst_10 = arith.constant 3.200000e+01 : f32
    %16 = vector.broadcast %cst_10 : f32 to vector<8x1xf32>
    %17 = arith.divf %15, %16 : vector<8x1xf32>
    %18 = vector.broadcast %17 : vector<8x1xf32> to vector<8x32xf32>
    %19 = arith.subf %9, %18 : vector<8x32xf32>
    %20 = arith.mulf %19, %19 : vector<8x32xf32>
    %cst_11 = arith.constant dense<0.000000e+00> : vector<8xf32>
    %21 = vector.multi_reduction <add>, %20, %cst_11 [1] : vector<8x32xf32> to vector<8xf32>
    %22 = vector.shape_cast %21 : vector<8xf32> to vector<8x1xf32>
    %cst_12 = arith.constant 3.200000e+01 : f32
    %23 = vector.broadcast %cst_12 : f32 to vector<8x1xf32>
    %24 = arith.divf %22, %23 : vector<8x1xf32>
    %cst_13 = arith.constant 9.99999974E-6 : f32
    %25 = vector.broadcast %cst_13 : f32 to vector<8x1xf32>
    %26 = arith.addf %24, %25 : vector<8x1xf32>
    %27 = math.rsqrt %26 : vector<8x1xf32>
    %28 = vector.broadcast %27 : vector<8x1xf32> to vector<8x32xf32>
    %29 = arith.mulf %19, %28 : vector<8x32xf32>
    %30 = vector.broadcast %11 : vector<1x32xf32> to vector<8x32xf32>
    %31 = arith.mulf %29, %30 : vector<8x32xf32>
    %32 = vector.broadcast %13 : vector<1x32xf32> to vector<8x32xf32>
    %33 = arith.addf %31, %32 : vector<8x32xf32>
    %34 = arith.truncf %33 : vector<8x32xf32> to vector<8x32xbf16>
    %c0_14 = arith.constant 0 : index
    %c0_15 = arith.constant 0 : index
    %c0_16 = arith.constant 0 : index
    %35 = vector.load %arg3[%c0_14, %c0_15, %c0_16] : memref<1x32x96xbf16, #tpu.memory_space<vmem>>, vector<1x32x96xbf16>
    %36 = vector.shape_cast %35 : vector<1x32x96xbf16> to vector<32x96xbf16>
    %cst_17 = arith.constant dense<0.000000e+00> : vector<8x96xf32>
    %37 = tpu.matmul %34, %36, %cst_17 {dimension_numbers = #tpu.dot_dimension_numbers<[1], [0], [0], [1], [0, 0, 1, 1], [], []>} : vector<8x32xbf16>, vector<32x96xbf16>, vector<8x96xf32> -> vector<8x96xf32>
    %c0_18 = arith.constant 0 : index
    %c0_19 = arith.constant 0 : index
    %c0_20 = arith.constant 0 : index
    %38 = vector.load %arg4[%c0_18, %c0_19, %c0_20] : memref<1x1x96xf32, #tpu.memory_space<vmem>>, vector<1x1x96xf32>
    %39 = vector.shape_cast %38 : vector<1x1x96xf32> to vector<1x96xf32>
    %40 = vector.broadcast %39 : vector<1x96xf32> to vector<8x96xf32>
    %41 = arith.addf %37, %40 : vector<8x96xf32>
    %42 = arith.truncf %41 : vector<8x96xf32> to vector<8x96xbf16>
    %43 = vector.extract_strided_slice %42 {offsets = [0, 0], sizes = [8, 8], strides = [1, 1]} : vector<8x96xbf16> to vector<8x8xbf16>
    %44 = vector.extract_strided_slice %42 {offsets = [0, 32], sizes = [8, 8], strides = [1, 1]} : vector<8x96xbf16> to vector<8x8xbf16>
    %45 = vector.extract_strided_slice %42 {offsets = [0, 64], sizes = [8, 8], strides = [1, 1]} : vector<8x96xbf16> to vector<8x8xbf16>
    %cst_21 = arith.constant dense<0.000000e+00> : vector<8x8xf32>
    %46 = tpu.matmul %43, %44, %cst_21 {dimension_numbers = #tpu.dot_dimension_numbers<[1], [1], [0], [0], [0, 0, 1, 0], [], []>} : vector<8x8xbf16>, vector<8x8xbf16>, vector<8x8xf32> -> vector<8x8xf32>
    %cst_22 = arith.constant 0.353553385 : f32
    %47 = vector.broadcast %cst_22 : f32 to vector<8x8xf32>
    %48 = arith.mulf %46, %47 : vector<8x8xf32>
    %49 = arith.addf %48, %8 : vector<8x8xf32>
    %cst_23 = arith.constant dense<0xFF800000> : vector<8xf32>
    %50 = vector.multi_reduction <maximumf>, %49, %cst_23 [1] : vector<8x8xf32> to vector<8xf32>
    %51 = vector.shape_cast %50 : vector<8xf32> to vector<8x1xf32>
    %52 = vector.broadcast %51 : vector<8x1xf32> to vector<8x8xf32>
    %53 = arith.subf %49, %52 : vector<8x8xf32>
    %54 = math.exp %53 : vector<8x8xf32>
    %cst_24 = arith.constant dense<0.000000e+00> : vector<8xf32>
    %55 = vector.multi_reduction <add>, %54, %cst_24 [1] : vector<8x8xf32> to vector<8xf32>
    %56 = vector.shape_cast %55 : vector<8xf32> to vector<8x1xf32>
    %57 = tpu.reciprocal %56 {approx = true} : vector<8x1xf32> -> vector<8x1xf32>
    %58 = vector.broadcast %57 : vector<8x1xf32> to vector<8x8xf32>
    %59 = arith.mulf %54, %58 : vector<8x8xf32>
    %60 = arith.truncf %59 : vector<8x8xf32> to vector<8x8xbf16>
    %cst_25 = arith.constant dense<0.000000e+00> : vector<8x8xf32>
    %61 = tpu.matmul %60, %45, %cst_25 {dimension_numbers = #tpu.dot_dimension_numbers<[1], [0], [0], [1], [0, 0, 1, 1], [], []>} : vector<8x8xbf16>, vector<8x8xbf16>, vector<8x8xf32> -> vector<8x8xf32>
    %62 = vector.extract_strided_slice %42 {offsets = [0, 8], sizes = [8, 8], strides = [1, 1]} : vector<8x96xbf16> to vector<8x8xbf16>
    %63 = vector.extract_strided_slice %42 {offsets = [0, 40], sizes = [8, 8], strides = [1, 1]} : vector<8x96xbf16> to vector<8x8xbf16>
    %64 = vector.extract_strided_slice %42 {offsets = [0, 72], sizes = [8, 8], strides = [1, 1]} : vector<8x96xbf16> to vector<8x8xbf16>
    %cst_26 = arith.constant dense<0.000000e+00> : vector<8x8xf32>
    %65 = tpu.matmul %62, %63, %cst_26 {dimension_numbers = #tpu.dot_dimension_numbers<[1], [1], [0], [0], [0, 0, 1, 0], [], []>} : vector<8x8xbf16>, vector<8x8xbf16>, vector<8x8xf32> -> vector<8x8xf32>
    %cst_27 = arith.constant 0.353553385 : f32
    %66 = vector.broadcast %cst_27 : f32 to vector<8x8xf32>
    %67 = arith.mulf %65, %66 : vector<8x8xf32>
    %68 = arith.addf %67, %8 : vector<8x8xf32>
    %cst_28 = arith.constant dense<0xFF800000> : vector<8xf32>
    %69 = vector.multi_reduction <maximumf>, %68, %cst_28 [1] : vector<8x8xf32> to vector<8xf32>
    %70 = vector.shape_cast %69 : vector<8xf32> to vector<8x1xf32>
    %71 = vector.broadcast %70 : vector<8x1xf32> to vector<8x8xf32>
    %72 = arith.subf %68, %71 : vector<8x8xf32>
    %73 = math.exp %72 : vector<8x8xf32>
    %cst_29 = arith.constant dense<0.000000e+00> : vector<8xf32>
    %74 = vector.multi_reduction <add>, %73, %cst_29 [1] : vector<8x8xf32> to vector<8xf32>
    %75 = vector.shape_cast %74 : vector<8xf32> to vector<8x1xf32>
    %76 = tpu.reciprocal %75 {approx = true} : vector<8x1xf32> -> vector<8x1xf32>
    %77 = vector.broadcast %76 : vector<8x1xf32> to vector<8x8xf32>
    %78 = arith.mulf %73, %77 : vector<8x8xf32>
    %79 = arith.truncf %78 : vector<8x8xf32> to vector<8x8xbf16>
    %cst_30 = arith.constant dense<0.000000e+00> : vector<8x8xf32>
    %80 = tpu.matmul %79, %64, %cst_30 {dimension_numbers = #tpu.dot_dimension_numbers<[1], [0], [0], [1], [0, 0, 1, 1], [], []>} : vector<8x8xbf16>, vector<8x8xbf16>, vector<8x8xf32> -> vector<8x8xf32>
    %81 = vector.extract_strided_slice %42 {offsets = [0, 16], sizes = [8, 8], strides = [1, 1]} : vector<8x96xbf16> to vector<8x8xbf16>
    %82 = vector.extract_strided_slice %42 {offsets = [0, 48], sizes = [8, 8], strides = [1, 1]} : vector<8x96xbf16> to vector<8x8xbf16>
    %83 = vector.extract_strided_slice %42 {offsets = [0, 80], sizes = [8, 8], strides = [1, 1]} : vector<8x96xbf16> to vector<8x8xbf16>
    %cst_31 = arith.constant dense<0.000000e+00> : vector<8x8xf32>
    %84 = tpu.matmul %81, %82, %cst_31 {dimension_numbers = #tpu.dot_dimension_numbers<[1], [1], [0], [0], [0, 0, 1, 0], [], []>} : vector<8x8xbf16>, vector<8x8xbf16>, vector<8x8xf32> -> vector<8x8xf32>
    %cst_32 = arith.constant 0.353553385 : f32
    %85 = vector.broadcast %cst_32 : f32 to vector<8x8xf32>
    %86 = arith.mulf %84, %85 : vector<8x8xf32>
    %87 = arith.addf %86, %8 : vector<8x8xf32>
    %cst_33 = arith.constant dense<0xFF800000> : vector<8xf32>
    %88 = vector.multi_reduction <maximumf>, %87, %cst_33 [1] : vector<8x8xf32> to vector<8xf32>
    %89 = vector.shape_cast %88 : vector<8xf32> to vector<8x1xf32>
    %90 = vector.broadcast %89 : vector<8x1xf32> to vector<8x8xf32>
    %91 = arith.subf %87, %90 : vector<8x8xf32>
    %92 = math.exp %91 : vector<8x8xf32>
    %cst_34 = arith.constant dense<0.000000e+00> : vector<8xf32>
    %93 = vector.multi_reduction <add>, %92, %cst_34 [1] : vector<8x8xf32> to vector<8xf32>
    %94 = vector.shape_cast %93 : vector<8xf32> to vector<8x1xf32>
    %95 = tpu.reciprocal %94 {approx = true} : vector<8x1xf32> -> vector<8x1xf32>
    %96 = vector.broadcast %95 : vector<8x1xf32> to vector<8x8xf32>
    %97 = arith.mulf %92, %96 : vector<8x8xf32>
    %98 = arith.truncf %97 : vector<8x8xf32> to vector<8x8xbf16>
    %cst_35 = arith.constant dense<0.000000e+00> : vector<8x8xf32>
    %99 = tpu.matmul %98, %83, %cst_35 {dimension_numbers = #tpu.dot_dimension_numbers<[1], [0], [0], [1], [0, 0, 1, 1], [], []>} : vector<8x8xbf16>, vector<8x8xbf16>, vector<8x8xf32> -> vector<8x8xf32>
    %100 = vector.extract_strided_slice %42 {offsets = [0, 24], sizes = [8, 8], strides = [1, 1]} : vector<8x96xbf16> to vector<8x8xbf16>
    %101 = vector.extract_strided_slice %42 {offsets = [0, 56], sizes = [8, 8], strides = [1, 1]} : vector<8x96xbf16> to vector<8x8xbf16>
    %102 = vector.extract_strided_slice %42 {offsets = [0, 88], sizes = [8, 8], strides = [1, 1]} : vector<8x96xbf16> to vector<8x8xbf16>
    %cst_36 = arith.constant dense<0.000000e+00> : vector<8x8xf32>
    %103 = tpu.matmul %100, %101, %cst_36 {dimension_numbers = #tpu.dot_dimension_numbers<[1], [1], [0], [0], [0, 0, 1, 0], [], []>} : vector<8x8xbf16>, vector<8x8xbf16>, vector<8x8xf32> -> vector<8x8xf32>
    %cst_37 = arith.constant 0.353553385 : f32
    %104 = vector.broadcast %cst_37 : f32 to vector<8x8xf32>
    %105 = arith.mulf %103, %104 : vector<8x8xf32>
    %106 = arith.addf %105, %8 : vector<8x8xf32>
    %cst_38 = arith.constant dense<0xFF800000> : vector<8xf32>
    %107 = vector.multi_reduction <maximumf>, %106, %cst_38 [1] : vector<8x8xf32> to vector<8xf32>
    %108 = vector.shape_cast %107 : vector<8xf32> to vector<8x1xf32>
    %109 = vector.broadcast %108 : vector<8x1xf32> to vector<8x8xf32>
    %110 = arith.subf %106, %109 : vector<8x8xf32>
    %111 = math.exp %110 : vector<8x8xf32>
    %cst_39 = arith.constant dense<0.000000e+00> : vector<8xf32>
    %112 = vector.multi_reduction <add>, %111, %cst_39 [1] : vector<8x8xf32> to vector<8xf32>
    %113 = vector.shape_cast %112 : vector<8xf32> to vector<8x1xf32>
    %114 = tpu.reciprocal %113 {approx = true} : vector<8x1xf32> -> vector<8x1xf32>
    %115 = vector.broadcast %114 : vector<8x1xf32> to vector<8x8xf32>
    %116 = arith.mulf %111, %115 : vector<8x8xf32>
    %117 = arith.truncf %116 : vector<8x8xf32> to vector<8x8xbf16>
    %cst_40 = arith.constant dense<0.000000e+00> : vector<8x8xf32>
    %118 = tpu.matmul %117, %102, %cst_40 {dimension_numbers = #tpu.dot_dimension_numbers<[1], [0], [0], [1], [0, 0, 1, 1], [], []>} : vector<8x8xbf16>, vector<8x8xbf16>, vector<8x8xf32> -> vector<8x8xf32>
    %119 = tpu.concatenate %61, %80, %99, %118 in 1 : vector<8x8xf32>, vector<8x8xf32>, vector<8x8xf32>, vector<8x8xf32> -> vector<8x32xf32>
    %120 = arith.truncf %119 : vector<8x32xf32> to vector<8x32xbf16>
    %c0_41 = arith.constant 0 : index
    %c0_42 = arith.constant 0 : index
    %c0_43 = arith.constant 0 : index
    %121 = vector.load %arg5[%c0_41, %c0_42, %c0_43] : memref<1x32x32xbf16, #tpu.memory_space<vmem>>, vector<1x32x32xbf16>
    %122 = vector.shape_cast %121 : vector<1x32x32xbf16> to vector<32x32xbf16>
    %cst_44 = arith.constant dense<0.000000e+00> : vector<8x32xf32>
    %123 = tpu.matmul %120, %122, %cst_44 {dimension_numbers = #tpu.dot_dimension_numbers<[1], [0], [0], [1], [0, 0, 1, 1], [], []>} : vector<8x32xbf16>, vector<32x32xbf16>, vector<8x32xf32> -> vector<8x32xf32>
    %c0_45 = arith.constant 0 : index
    %c0_46 = arith.constant 0 : index
    %c0_47 = arith.constant 0 : index
    %124 = vector.load %arg6[%c0_45, %c0_46, %c0_47] : memref<1x1x32xf32, #tpu.memory_space<vmem>>, vector<1x1x32xf32>
    %125 = vector.shape_cast %124 : vector<1x1x32xf32> to vector<1x32xf32>
    %126 = vector.broadcast %125 : vector<1x32xf32> to vector<8x32xf32>
    %127 = arith.addf %123, %126 : vector<8x32xf32>
    %128 = arith.addf %9, %127 : vector<8x32xf32>
    %c0_48 = arith.constant 0 : index
    %c0_49 = arith.constant 0 : index
    %c0_50 = arith.constant 0 : index
    %129 = vector.load %arg9[%c0_48, %c0_49, %c0_50] : memref<1x1x32xf32, #tpu.memory_space<vmem>>, vector<1x1x32xf32>
    %130 = vector.shape_cast %129 : vector<1x1x32xf32> to vector<1x32xf32>
    %c0_51 = arith.constant 0 : index
    %c0_52 = arith.constant 0 : index
    %c0_53 = arith.constant 0 : index
    %131 = vector.load %arg10[%c0_51, %c0_52, %c0_53] : memref<1x1x32xf32, #tpu.memory_space<vmem>>, vector<1x1x32xf32>
    %132 = vector.shape_cast %131 : vector<1x1x32xf32> to vector<1x32xf32>
    %cst_54 = arith.constant dense<0.000000e+00> : vector<8xf32>
    %133 = vector.multi_reduction <add>, %128, %cst_54 [1] : vector<8x32xf32> to vector<8xf32>
    %134 = vector.shape_cast %133 : vector<8xf32> to vector<8x1xf32>
    %cst_55 = arith.constant 3.200000e+01 : f32
    %135 = vector.broadcast %cst_55 : f32 to vector<8x1xf32>
    %136 = arith.divf %134, %135 : vector<8x1xf32>
    %137 = vector.broadcast %136 : vector<8x1xf32> to vector<8x32xf32>
    %138 = arith.subf %128, %137 : vector<8x32xf32>
    %139 = arith.mulf %138, %138 : vector<8x32xf32>
    %cst_56 = arith.constant dense<0.000000e+00> : vector<8xf32>
    %140 = vector.multi_reduction <add>, %139, %cst_56 [1] : vector<8x32xf32> to vector<8xf32>
    %141 = vector.shape_cast %140 : vector<8xf32> to vector<8x1xf32>
    %cst_57 = arith.constant 3.200000e+01 : f32
    %142 = vector.broadcast %cst_57 : f32 to vector<8x1xf32>
    %143 = arith.divf %141, %142 : vector<8x1xf32>
    %cst_58 = arith.constant 9.99999974E-6 : f32
    %144 = vector.broadcast %cst_58 : f32 to vector<8x1xf32>
    %145 = arith.addf %143, %144 : vector<8x1xf32>
    %146 = math.rsqrt %145 : vector<8x1xf32>
    %147 = vector.broadcast %146 : vector<8x1xf32> to vector<8x32xf32>
    %148 = arith.mulf %138, %147 : vector<8x32xf32>
    %149 = vector.broadcast %130 : vector<1x32xf32> to vector<8x32xf32>
    %150 = arith.mulf %148, %149 : vector<8x32xf32>
    %151 = vector.broadcast %132 : vector<1x32xf32> to vector<8x32xf32>
    %152 = arith.addf %150, %151 : vector<8x32xf32>
    %153 = arith.truncf %152 : vector<8x32xf32> to vector<8x32xbf16>
    %c0_59 = arith.constant 0 : index
    %c0_60 = arith.constant 0 : index
    %c0_61 = arith.constant 0 : index
    %154 = vector.load %arg11[%c0_59, %c0_60, %c0_61] : memref<1x32x128xbf16, #tpu.memory_space<vmem>>, vector<1x32x128xbf16>
    %155 = vector.shape_cast %154 : vector<1x32x128xbf16> to vector<32x128xbf16>
    %cst_62 = arith.constant dense<0.000000e+00> : vector<8x128xf32>
    %156 = tpu.matmul %153, %155, %cst_62 {dimension_numbers = #tpu.dot_dimension_numbers<[1], [0], [0], [1], [0, 0, 1, 1], [], []>} : vector<8x32xbf16>, vector<32x128xbf16>, vector<8x128xf32> -> vector<8x128xf32>
    %c0_63 = arith.constant 0 : index
    %c0_64 = arith.constant 0 : index
    %c0_65 = arith.constant 0 : index
    %157 = vector.load %arg12[%c0_63, %c0_64, %c0_65] : memref<1x1x128xf32, #tpu.memory_space<vmem>>, vector<1x1x128xf32>
    %158 = vector.shape_cast %157 : vector<1x1x128xf32> to vector<1x128xf32>
    %159 = vector.broadcast %158 : vector<1x128xf32> to vector<8x128xf32>
    %160 = arith.addf %156, %159 : vector<8x128xf32>
    %cst_66 = arith.constant 5.000000e-01 : f32
    %161 = vector.broadcast %cst_66 : f32 to vector<8x128xf32>
    %162 = arith.mulf %161, %160 : vector<8x128xf32>
    %cst_67 = arith.constant 4.471500e-02 : f32
    %163 = vector.broadcast %cst_67 : f32 to vector<8x128xf32>
    %164 = arith.mulf %163, %160 : vector<8x128xf32>
    %165 = arith.mulf %164, %160 : vector<8x128xf32>
    %166 = arith.mulf %165, %160 : vector<8x128xf32>
    %167 = arith.addf %160, %166 : vector<8x128xf32>
    %cst_68 = arith.constant 0.797884583 : f32
    %168 = vector.broadcast %cst_68 : f32 to vector<8x128xf32>
    %169 = arith.mulf %168, %167 : vector<8x128xf32>
    %170 = math.tanh %169 : vector<8x128xf32>
    %cst_69 = arith.constant 1.000000e+00 : f32
    %171 = vector.broadcast %cst_69 : f32 to vector<8x128xf32>
    %172 = arith.addf %171, %170 : vector<8x128xf32>
    %173 = arith.mulf %162, %172 : vector<8x128xf32>
    %174 = arith.truncf %173 : vector<8x128xf32> to vector<8x128xbf16>
    %c0_70 = arith.constant 0 : index
    %c0_71 = arith.constant 0 : index
    %c0_72 = arith.constant 0 : index
    %175 = vector.load %arg13[%c0_70, %c0_71, %c0_72] : memref<1x128x32xbf16, #tpu.memory_space<vmem>>, vector<1x128x32xbf16>
    %176 = vector.shape_cast %175 : vector<1x128x32xbf16> to vector<128x32xbf16>
    %cst_73 = arith.constant dense<0.000000e+00> : vector<8x32xf32>
    %177 = tpu.matmul %174, %176, %cst_73 {dimension_numbers = #tpu.dot_dimension_numbers<[1], [0], [0], [1], [0, 0, 1, 1], [], []>} : vector<8x128xbf16>, vector<128x32xbf16>, vector<8x32xf32> -> vector<8x32xf32>
    %178 = arith.addf %128, %177 : vector<8x32xf32>
    %c0_74 = arith.constant 0 : index
    %c0_75 = arith.constant 0 : index
    %c0_76 = arith.constant 0 : index
    %179 = vector.load %arg14[%c0_74, %c0_75, %c0_76] : memref<1x1x32xf32, #tpu.memory_space<vmem>>, vector<1x1x32xf32>
    %180 = vector.shape_cast %179 : vector<1x1x32xf32> to vector<1x32xf32>
    %181 = vector.broadcast %180 : vector<1x32xf32> to vector<8x32xf32>
    %182 = arith.addf %178, %181 : vector<8x32xf32>
    %c0_77 = arith.constant 0 : index
    %c0_78 = arith.constant 0 : index
    %183 = vector.load %arg18[%c0_77, %c0_78] : memref<8x32xf32, #tpu.memory_space<vmem>>, vector<8x32xf32>
    tpu.vector_store %arg18[%c0_77, %c0_78], %182 {strides = array<i32>} : memref<8x32xf32, #tpu.memory_space<vmem>>, vector<8x32xf32>,
    %c1_i32 = arith.constant 1 : i32
    %184 = arith.cmpi eq, %arg1, %c1_i32 : i32
    %185 = arith.extui %184 : i1 to i32
    %c0_i32_79 = arith.constant 0 : i32
    %186 = arith.cmpi ne, %185, %c0_i32_79 : i32
    scf.if %186 {
      %c0_80 = arith.constant 0 : index
      %c0_81 = arith.constant 0 : index
      %187 = vector.load %arg18[%c0_80, %c0_81] : memref<8x32xf32, #tpu.memory_space<vmem>>, vector<8x32xf32>
      %c0_82 = arith.constant 0 : index
      %c0_83 = arith.constant 0 : index
      %188 = vector.load %arg15[%c0_82, %c0_83] : memref<1x32xf32, #tpu.memory_space<vmem>>, vector<1x32xf32>
      %c0_84 = arith.constant 0 : index
      %c0_85 = arith.constant 0 : index
      %189 = vector.load %arg16[%c0_84, %c0_85] : memref<1x32xf32, #tpu.memory_space<vmem>>, vector<1x32xf32>
      %cst_86 = arith.constant dense<0.000000e+00> : vector<8xf32>
      %190 = vector.multi_reduction <add>, %187, %cst_86 [1] : vector<8x32xf32> to vector<8xf32>
      %191 = vector.shape_cast %190 : vector<8xf32> to vector<8x1xf32>
      %cst_87 = arith.constant 3.200000e+01 : f32
      %192 = vector.broadcast %cst_87 : f32 to vector<8x1xf32>
      %193 = arith.divf %191, %192 : vector<8x1xf32>
      %194 = vector.broadcast %193 : vector<8x1xf32> to vector<8x32xf32>
      %195 = arith.subf %187, %194 : vector<8x32xf32>
      %196 = arith.mulf %195, %195 : vector<8x32xf32>
      %cst_88 = arith.constant dense<0.000000e+00> : vector<8xf32>
      %197 = vector.multi_reduction <add>, %196, %cst_88 [1] : vector<8x32xf32> to vector<8xf32>
      %198 = vector.shape_cast %197 : vector<8xf32> to vector<8x1xf32>
      %cst_89 = arith.constant 3.200000e+01 : f32
      %199 = vector.broadcast %cst_89 : f32 to vector<8x1xf32>
      %200 = arith.divf %198, %199 : vector<8x1xf32>
      %cst_90 = arith.constant 9.99999974E-6 : f32
      %201 = vector.broadcast %cst_90 : f32 to vector<8x1xf32>
      %202 = arith.addf %200, %201 : vector<8x1xf32>
      %203 = math.rsqrt %202 : vector<8x1xf32>
      %204 = vector.broadcast %203 : vector<8x1xf32> to vector<8x32xf32>
      %205 = arith.mulf %195, %204 : vector<8x32xf32>
      %206 = vector.broadcast %188 : vector<1x32xf32> to vector<8x32xf32>
      %207 = arith.mulf %205, %206 : vector<8x32xf32>
      %208 = vector.broadcast %189 : vector<1x32xf32> to vector<8x32xf32>
      %209 = arith.addf %207, %208 : vector<8x32xf32>
      %c0_91 = arith.constant 0 : index
      %c0_92 = arith.constant 0 : index
      %c0_93 = arith.constant 0 : index
      %210 = vector.load %arg17[%c0_91, %c0_92, %c0_93] : memref<1x8x32xf32, #tpu.memory_space<vmem>>, vector<1x8x32xf32>
      %211 = vector.shape_cast %210 : vector<1x8x32xf32> to vector<8x32xf32>
      %212 = vector.shape_cast %209 : vector<8x32xf32> to vector<1x8x32xf32>
      tpu.vector_store %arg17[%c0_91, %c0_92, %c0_93], %212 {strides = array<i32>} : memref<1x8x32xf32, #tpu.memory_space<vmem>>, vector<1x8x32xf32>,
    } else {
    }
    return
  }
  func.func @transform_0(%arg0: i32, %arg1: i32) -> (i32, i32, i32) {
    %c0_i32 = arith.constant 0 : i32
    %c0_i32_0 = arith.constant 0 : i32
    %c0_i32_1 = arith.constant 0 : i32
    return %arg0, %c0_i32, %c0_i32_0 : i32, i32, i32
  }
  func.func @transform_1(%arg0: i32, %arg1: i32) -> (i32, i32, i32) {
    %c0_i32 = arith.constant 0 : i32
    %c0_i32_0 = arith.constant 0 : i32
    %c0_i32_1 = arith.constant 0 : i32
    return %arg1, %c0_i32, %c0_i32_0 : i32, i32, i32
  }
  func.func @transform_2(%arg0: i32, %arg1: i32) -> (i32, i32, i32) {
    %c0_i32 = arith.constant 0 : i32
    %c0_i32_0 = arith.constant 0 : i32
    %c0_i32_1 = arith.constant 0 : i32
    return %arg1, %c0_i32, %c0_i32_0 : i32, i32, i32
  }
  func.func @transform_3(%arg0: i32, %arg1: i32) -> (i32, i32, i32) {
    %c0_i32 = arith.constant 0 : i32
    %c0_i32_0 = arith.constant 0 : i32
    %c0_i32_1 = arith.constant 0 : i32
    return %arg1, %c0_i32, %c0_i32_0 : i32, i32, i32
  }
  func.func @transform_4(%arg0: i32, %arg1: i32) -> (i32, i32, i32) {
    %c0_i32 = arith.constant 0 : i32
    %c0_i32_0 = arith.constant 0 : i32
    %c0_i32_1 = arith.constant 0 : i32
    return %arg1, %c0_i32, %c0_i32_0 : i32, i32, i32
  }
  func.func @transform_5(%arg0: i32, %arg1: i32) -> (i32, i32, i32) {
    %c0_i32 = arith.constant 0 : i32
    %c0_i32_0 = arith.constant 0 : i32
    %c0_i32_1 = arith.constant 0 : i32
    return %arg1, %c0_i32, %c0_i32_0 : i32, i32, i32
  }
  func.func @transform_6(%arg0: i32, %arg1: i32) -> (i32, i32, i32) {
    %c0_i32 = arith.constant 0 : i32
    %c0_i32_0 = arith.constant 0 : i32
    %c0_i32_1 = arith.constant 0 : i32
    return %arg1, %c0_i32, %c0_i32_0 : i32, i32, i32
  }
  func.func @transform_7(%arg0: i32, %arg1: i32) -> (i32, i32, i32) {
    %c0_i32 = arith.constant 0 : i32
    %c0_i32_0 = arith.constant 0 : i32
    %c0_i32_1 = arith.constant 0 : i32
    return %arg1, %c0_i32, %c0_i32_0 : i32, i32, i32
  }
  func.func @transform_8(%arg0: i32, %arg1: i32) -> (i32, i32, i32) {
    %c0_i32 = arith.constant 0 : i32
    %c0_i32_0 = arith.constant 0 : i32
    %c0_i32_1 = arith.constant 0 : i32
    return %arg1, %c0_i32, %c0_i32_0 : i32, i32, i32
  }
  func.func @transform_9(%arg0: i32, %arg1: i32) -> (i32, i32, i32) {
    %c0_i32 = arith.constant 0 : i32
    %c0_i32_0 = arith.constant 0 : i32
    %c0_i32_1 = arith.constant 0 : i32
    return %arg1, %c0_i32, %c0_i32_0 : i32, i32, i32
  }
  func.func @transform_10(%arg0: i32, %arg1: i32) -> (i32, i32, i32) {
    %c0_i32 = arith.constant 0 : i32
    %c0_i32_0 = arith.constant 0 : i32
    %c0_i32_1 = arith.constant 0 : i32
    return %arg1, %c0_i32, %c0_i32_0 : i32, i32, i32
  }
  func.func @transform_11(%arg0: i32, %arg1: i32) -> (i32, i32, i32) {
    %c0_i32 = arith.constant 0 : i32
    %c0_i32_0 = arith.constant 0 : i32
    %c0_i32_1 = arith.constant 0 : i32
    return %arg1, %c0_i32, %c0_i32_0 : i32, i32, i32
  }
  func.func @transform_12(%arg0: i32, %arg1: i32) -> (i32, i32, i32) {
    %c0_i32 = arith.constant 0 : i32
    %c0_i32_0 = arith.constant 0 : i32
    %c0_i32_1 = arith.constant 0 : i32
    return %arg1, %c0_i32, %c0_i32_0 : i32, i32, i32
  }
  func.func @transform_13(%arg0: i32, %arg1: i32) -> (i32, i32) {
    %c0_i32 = arith.constant 0 : i32
    %c0_i32_0 = arith.constant 0 : i32
    %c0_i32_1 = arith.constant 0 : i32
    return %c0_i32, %c0_i32_0 : i32, i32
  }
  func.func @transform_14(%arg0: i32, %arg1: i32) -> (i32, i32) {
    %c0_i32 = arith.constant 0 : i32
    %c0_i32_0 = arith.constant 0 : i32
    %c0_i32_1 = arith.constant 0 : i32
    return %c0_i32, %c0_i32_0 : i32, i32
  }
  func.func @transform_15(%arg0: i32, %arg1: i32) -> (i32, i32, i32) {
    %c0_i32 = arith.constant 0 : i32
    %c0_i32_0 = arith.constant 0 : i32
    %c0_i32_1 = arith.constant 0 : i32
    return %arg0, %c0_i32, %c0_i32_0 : i32, i32, i32
  }
}

</mosaic_0001>

<llo_original>
// kernel: tpu_custom_call.1
$region0: #{tpu_custom_call.1}
  #allocation0 [shape = 'u32[]', space=smem, size = 0x4, offset = 0x4, fixed_abs, tag = 'smem constant byte address 0x4 - core index']
  #allocation1 [shape = 'u32[72,128]{1,0:T(1,128)}', space=vmem, size = 0x9000, scoped, tag = 'internal scratch']
  #allocation2 [shape = 'f32[8,32]{1,0:T(8,128)}', space=vmem, size = 0x1000, scoped, tag = 'scratch operand']
  %s0 = inlined_call_operand.vmem [shape: f32[2,8,32], index: 0, kind: input, shape index: {}]
  %s1 = inlined_call_operand.vmem [shape: bf16[2,32,96], index: 1, kind: input, shape index: {}]
  %s2 = inlined_call_operand.vmem [shape: f32[2,1,96], index: 2, kind: input, shape index: {}]
  %s3 = inlined_call_operand.vmem [shape: bf16[2,32,32], index: 3, kind: input, shape index: {}]
  %s4 = inlined_call_operand.vmem [shape: f32[2,1,32], index: 4, kind: input, shape index: {}]
  %s5 = inlined_call_operand.vmem [shape: f32[2,1,32], index: 5, kind: input, shape index: {}]
  %s6 = inlined_call_operand.vmem [shape: f32[2,1,32], index: 6, kind: input, shape index: {}]
  %s7 = inlined_call_operand.vmem [shape: f32[2,1,32], index: 7, kind: input, shape index: {}]
  %s8 = inlined_call_operand.vmem [shape: f32[2,1,32], index: 8, kind: input, shape index: {}]
  %s9 = inlined_call_operand.vmem [shape: bf16[2,32,128], index: 9, kind: input, shape index: {}]
  %s10 = inlined_call_operand.vmem [shape: f32[2,1,128], index: 10, kind: input, shape index: {}]
  %s11 = inlined_call_operand.vmem [shape: bf16[2,128,32], index: 11, kind: input, shape index: {}]
  %s12 = inlined_call_operand.vmem [shape: f32[2,1,32], index: 12, kind: input, shape index: {}]
  %s13 = inlined_call_operand.vmem [shape: f32[1,32], index: 13, kind: input, shape index: {}]
  %s14 = inlined_call_operand.vmem [shape: f32[1,32], index: 14, kind: input, shape index: {}]
  %s15 = inlined_call_operand.hbm [shape: f32[2,8,32], index: 15, kind: output, shape index: {}]
  %s16 = sld [smem:[#allocation0]]
  $region101: #{tpu_custom_call.1} parent=0
    _
  %s18 = ssub.s32 1, %s16
  %s19 = scalar_select 0, %s18, %s16
  $region1: #{tpu_custom_call.1} parent=0
    #allocation3 [shape = 'u8[8192]{0}', space=vmem, size = 0x2000, scoped, tag = 'output window, operand 0']
    #allocation4 [shape = 's32[2]{0}', space=sflag, size = 0x8, scoped, tag = 'scoped memory for tpu_custom_call.1']
    %20 = vsyncpa [#allocation4], 0
    %s21 = scalar_lea.sflag [#allocation4], 1
    %22 = vsyncpa %s21, 0
    loop: start=0, step=1, limit=6
    $region2: #{tpu_custom_call.1} parent=1 // loop_pre_header
      _
    $region3: #{tpu_custom_call.1} parent=1 // loop_header
      %s24 = sphi 0, %s28
      %p25 = scmp.ge.s32.totalorder %s24, 6
      %s31 = sphi 0, %s43
      %s32 = sphi 0, %s39
      %s33 = sphi 0, %s31
      %s34 = sphi 0, %s32
      %s35 = sphi 0, %s33
      %s36 = sphi 0, %s34
      %s46 = sphi 0, %s48
      %s49 = sphi 0, %s46
      %s50 = sphi 0, %s49
      %s66 = sphi 0, %s50
      %s72 = sphi 0, %s74
      %s75 = sphi 0, %s72
      %s76 = sphi 0, %s75
      %s92 = sphi 0, %s76
      %s98 = sphi 0, %s100
      %s101 = sphi 0, %s98
      %s102 = sphi 0, %s101
      %s118 = sphi 0, %s102
      %s124 = sphi 0, %s126
      %s127 = sphi 0, %s124
      %s128 = sphi 0, %s127
      %s144 = sphi 0, %s128
      %s150 = sphi 0, %s152
      %s153 = sphi 0, %s150
      %s154 = sphi 0, %s153
      %s170 = sphi 0, %s154
      %s176 = sphi 0, %s178
      %s179 = sphi 0, %s176
      %s180 = sphi 0, %s179
      %s196 = sphi 0, %s180
      %s202 = sphi 0, %s204
      %s205 = sphi 0, %s202
      %s206 = sphi 0, %s205
      %s222 = sphi 0, %s206
      %s228 = sphi 0, %s230
      %s231 = sphi 0, %s228
      %s232 = sphi 0, %s231
      %s248 = sphi 0, %s232
      %s254 = sphi 0, %s256
      %s257 = sphi 0, %s254
      %s258 = sphi 0, %s257
      %s274 = sphi 0, %s258
      %s280 = sphi 0, %s282
      %s283 = sphi 0, %s280
      %s284 = sphi 0, %s283
      %s300 = sphi 0, %s284
      %s306 = sphi 0, %s308
      %s309 = sphi 0, %s306
      %s310 = sphi 0, %s309
      %s326 = sphi 0, %s310
      %s332 = sphi 0, %s334
      %s335 = sphi 0, %s332
      %s336 = sphi 0, %s335
      %s352 = sphi 0, %s336
      %s358 = sphi 0, %s360
      %s361 = sphi 0, %s358
      %s362 = sphi 0, %s361
      %s378 = sphi 0, %s362
      %s382 = sphi 0, %s382
      %s384 = sphi 0, %s382
      %s385 = sphi 0, %s384
      %s399 = sphi 0, %s385
      %s403 = sphi 0, %s403
      %s405 = sphi 0, %s403
      %s406 = sphi 0, %s405
      %s420 = sphi 0, %s406
      %s426 = sphi 0, %s428
      %s429 = sphi 0, %s426
      %s430 = sphi 0, %s429
      %s446 = sphi 0, %s430
    $region4: #{tpu_custom_call.1} parent=1 // loop_header_branch
      %27 = sbr.rel (%p25) target = $region8
    $region5: #{tpu_custom_call.1} parent=1 // loop_body
      %s29 = ssub.s32 %s24, 1
      %s30 = ssub.s32 %s24, 2
      %s37 = sadd.s32 1, %s32
      %p38 = scmp.ge.s32.totalorder %s37, 2
      %s39 = scalar_select %p38, 0, %s37
      %s40 = sadd.s32 1, %s31
      %s41 = scalar_select %p38, %s40, %s31
      %p42 = scmp.ge.s32.totalorder %s41, 2
      %s43 = scalar_select %p42, 0, %s41
      %s44 = ssub.s32 %s31, %s43
      %p45 = scmp.eq.s32.totalorder %s44, 0
      %s47 = sadd.s32 %s46, 1
      %s48 = scalar_select %p45, %s46, %s47
      %p51 = pneg %p45
      %p52 = scmp.eq.s32.totalorder %s24, 3
      %p53 = por %p51, %p52
      %p54 = scmp.ne.s32.totalorder %s46, %s49
      %p55 = scmp.eq.s32.totalorder %s24, 0
      %p56 = por %p54, %p55
      %p57 = scmp.ne.s32.totalorder %s46, %s49
      %p58 = scmp.eq.s32.totalorder %s29, 3
      %p59 = por %p57, %p58
      %p60 = scmp.ne.s32.totalorder %s49, %s50
      %p61 = scmp.eq.s32.totalorder %s29, 0
      %p62 = por %p60, %p61
      %p63 = scmp.ne.s32.totalorder %s49, %s50
      %p64 = scmp.eq.s32.totalorder %s30, 3
      %p65 = por %p63, %p64
      %p67 = scmp.ne.s32.totalorder %s50, %s66
      %p68 = scmp.eq.s32.totalorder %s30, 0
      %p69 = por %p67, %p68
      %s70 = ssub.s32 %s32, %s39
      %p71 = scmp.eq.s32.totalorder %s70, 0
      %s73 = sadd.s32 %s72, 1
      %s74 = scalar_select %p71, %s72, %s73
      %p77 = pneg %p71
      %p78 = scmp.eq.s32.totalorder %s24, 3
      %p79 = por %p77, %p78
      %p80 = scmp.ne.s32.totalorder %s72, %s75
      %p81 = scmp.eq.s32.totalorder %s24, 0
      %p82 = por %p80, %p81
      %p83 = scmp.ne.s32.totalorder %s72, %s75
      %p84 = scmp.eq.s32.totalorder %s29, 3
      %p85 = por %p83, %p84
      %p86 = scmp.ne.s32.totalorder %s75, %s76
      %p87 = scmp.eq.s32.totalorder %s29, 0
      %p88 = por %p86, %p87
      %p89 = scmp.ne.s32.totalorder %s75, %s76
      %p90 = scmp.eq.s32.totalorder %s30, 3
      %p91 = por %p89, %p90
      %p93 = scmp.ne.s32.totalorder %s76, %s92
      %p94 = scmp.eq.s32.totalorder %s30, 0
      %p95 = por %p93, %p94
      %s96 = ssub.s32 %s32, %s39
      %p97 = scmp.eq.s32.totalorder %s96, 0
      %s99 = sadd.s32 %s98, 1
      %s100 = scalar_select %p97, %s98, %s99
      %p103 = pneg %p97
      %p104 = scmp.eq.s32.totalorder %s24, 3
      %p105 = por %p103, %p104
      %p106 = scmp.ne.s32.totalorder %s98, %s101
      %p107 = scmp.eq.s32.totalorder %s24, 0
      %p108 = por %p106, %p107
      %p109 = scmp.ne.s32.totalorder %s98, %s101
      %p110 = scmp.eq.s32.totalorder %s29, 3
      %p111 = por %p109, %p110
      %p112 = scmp.ne.s32.totalorder %s101, %s102
      %p113 = scmp.eq.s32.totalorder %s29, 0
      %p114 = por %p112, %p113
      %p115 = scmp.ne.s32.totalorder %s101, %s102
      %p116 = scmp.eq.s32.totalorder %s30, 3
      %p117 = por %p115, %p116
      %p119 = scmp.ne.s32.totalorder %s102, %s118
      %p120 = scmp.eq.s32.totalorder %s30, 0
      %p121 = por %p119, %p120
      %s122 = ssub.s32 %s32, %s39
      %p123 = scmp.eq.s32.totalorder %s122, 0
      %s125 = sadd.s32 %s124, 1
      %s126 = scalar_select %p123, %s124, %s125
      %p129 = pneg %p123
      %p130 = scmp.eq.s32.totalorder %s24, 3
      %p131 = por %p129, %p130
      %p132 = scmp.ne.s32.totalorder %s124, %s127
      %p133 = scmp.eq.s32.totalorder %s24, 0
      %p134 = por %p132, %p133
      %p135 = scmp.ne.s32.totalorder %s124, %s127
      %p136 = scmp.eq.s32.totalorder %s29, 3
      %p137 = por %p135, %p136
      %p138 = scmp.ne.s32.totalorder %s127, %s128
      %p139 = scmp.eq.s32.totalorder %s29, 0
      %p140 = por %p138, %p139
      %p141 = scmp.ne.s32.totalorder %s127, %s128
      %p142 = scmp.eq.s32.totalorder %s30, 3
      %p143 = por %p141, %p142
      %p145 = scmp.ne.s32.totalorder %s128, %s144
      %p146 = scmp.eq.s32.totalorder %s30, 0
      %p147 = por %p145, %p146
      %s148 = ssub.s32 %s32, %s39
      %p149 = scmp.eq.s32.totalorder %s148, 0
      %s151 = sadd.s32 %s150, 1
      %s152 = scalar_select %p149, %s150, %s151
      %p155 = pneg %p149
      %p156 = scmp.eq.s32.totalorder %s24, 3
      %p157 = por %p155, %p156
      %p158 = scmp.ne.s32.totalorder %s150, %s153
      %p159 = scmp.eq.s32.totalorder %s24, 0
      %p160 = por %p158, %p159
      %p161 = scmp.ne.s32.totalorder %s150, %s153
      %p162 = scmp.eq.s32.totalorder %s29, 3
      %p163 = por %p161, %p162
      %p164 = scmp.ne.s32.totalorder %s153, %s154
      %p165 = scmp.eq.s32.totalorder %s29, 0
      %p166 = por %p164, %p165
      %p167 = scmp.ne.s32.totalorder %s153, %s154
      %p168 = scmp.eq.s32.totalorder %s30, 3
      %p169 = por %p167, %p168
      %p171 = scmp.ne.s32.totalorder %s154, %s170
      %p172 = scmp.eq.s32.totalorder %s30, 0
      %p173 = por %p171, %p172
      %s174 = ssub.s32 %s32, %s39
      %p175 = scmp.eq.s32.totalorder %s174, 0
      %s177 = sadd.s32 %s176, 1
      %s178 = scalar_select %p175, %s176, %s177
      %p181 = pneg %p175
      %p182 = scmp.eq.s32.totalorder %s24, 3
      %p183 = por %p181, %p182
      %p184 = scmp.ne.s32.totalorder %s176, %s179
      %p185 = scmp.eq.s32.totalorder %s24, 0
      %p186 = por %p184, %p185
      %p187 = scmp.ne.s32.totalorder %s176, %s179
      %p188 = scmp.eq.s32.totalorder %s29, 3
      %p189 = por %p187, %p188
      %p190 = scmp.ne.s32.totalorder %s179, %s180
      %p191 = scmp.eq.s32.totalorder %s29, 0
      %p192 = por %p190, %p191
      %p193 = scmp.ne.s32.totalorder %s179, %s180
      %p194 = scmp.eq.s32.totalorder %s30, 3
      %p195 = por %p193, %p194
      %p197 = scmp.ne.s32.totalorder %s180, %s196
      %p198 = scmp.eq.s32.totalorder %s30, 0
      %p199 = por %p197, %p198
      %s200 = ssub.s32 %s32, %s39
      %p201 = scmp.eq.s32.totalorder %s200, 0
      %s203 = sadd.s32 %s202, 1
      %s204 = scalar_select %p201, %s202, %s203
      %p207 = pneg %p201
      %p208 = scmp.eq.s32.totalorder %s24, 3
      %p209 = por %p207, %p208
      %p210 = scmp.ne.s32.totalorder %s202, %s205
      %p211 = scmp.eq.s32.totalorder %s24, 0
      %p212 = por %p210, %p211
      %p213 = scmp.ne.s32.totalorder %s202, %s205
      %p214 = scmp.eq.s32.totalorder %s29, 3
      %p215 = por %p213, %p214
      %p216 = scmp.ne.s32.totalorder %s205, %s206
      %p217 = scmp.eq.s32.totalorder %s29, 0
      %p218 = por %p216, %p217
      %p219 = scmp.ne.s32.totalorder %s205, %s206
      %p220 = scmp.eq.s32.totalorder %s30, 3
      %p221 = por %p219, %p220
      %p223 = scmp.ne.s32.totalorder %s206, %s222
      %p224 = scmp.eq.s32.totalorder %s30, 0
      %p225 = por %p223, %p224
      %s226 = ssub.s32 %s32, %s39
      %p227 = scmp.eq.s32.totalorder %s226, 0
      %s229 = sadd.s32 %s228, 1
      %s230 = scalar_select %p227, %s228, %s229
      %p233 = pneg %p227
      %p234 = scmp.eq.s32.totalorder %s24, 3
      %p235 = por %p233, %p234
      %p236 = scmp.ne.s32.totalorder %s228, %s231
      %p237 = scmp.eq.s32.totalorder %s24, 0
      %p238 = por %p236, %p237
      %p239 = scmp.ne.s32.totalorder %s228, %s231
      %p240 = scmp.eq.s32.totalorder %s29, 3
      %p241 = por %p239, %p240
      %p242 = scmp.ne.s32.totalorder %s231, %s232
      %p243 = scmp.eq.s32.totalorder %s29, 0
      %p244 = por %p242, %p243
      %p245 = scmp.ne.s32.totalorder %s231, %s232
      %p246 = scmp.eq.s32.totalorder %s30, 3
      %p247 = por %p245, %p246
      %p249 = scmp.ne.s32.totalorder %s232, %s248
      %p250 = scmp.eq.s32.totalorder %s30, 0
      %p251 = por %p249, %p250
      %s252 = ssub.s32 %s32, %s39
      %p253 = scmp.eq.s32.totalorder %s252, 0
      %s255 = sadd.s32 %s254, 1
      %s256 = scalar_select %p253, %s254, %s255
      %p259 = pneg %p253
      %p260 = scmp.eq.s32.totalorder %s24, 3
      %p261 = por %p259, %p260
      %p262 = scmp.ne.s32.totalorder %s254, %s257
      %p263 = scmp.eq.s32.totalorder %s24, 0
      %p264 = por %p262, %p263
      %p265 = scmp.ne.s32.totalorder %s254, %s257
      %p266 = scmp.eq.s32.totalorder %s29, 3
      %p267 = por %p265, %p266
      %p268 = scmp.ne.s32.totalorder %s257, %s258
      %p269 = scmp.eq.s32.totalorder %s29, 0
      %p270 = por %p268, %p269
      %p271 = scmp.ne.s32.totalorder %s257, %s258
      %p272 = scmp.eq.s32.totalorder %s30, 3
      %p273 = por %p271, %p272
      %p275 = scmp.ne.s32.totalorder %s258, %s274
      %p276 = scmp.eq.s32.totalorder %s30, 0
      %p277 = por %p275, %p276
      %s278 = ssub.s32 %s32, %s39
      %p279 = scmp.eq.s32.totalorder %s278, 0
      %s281 = sadd.s32 %s280, 1
      %s282 = scalar_select %p279, %s280, %s281
      %p285 = pneg %p279
      %p286 = scmp.eq.s32.totalorder %s24, 3
      %p287 = por %p285, %p286
      %p288 = scmp.ne.s32.totalorder %s280, %s283
      %p289 = scmp.eq.s32.totalorder %s24, 0
      %p290 = por %p288, %p289
      %p291 = scmp.ne.s32.totalorder %s280, %s283
      %p292 = scmp.eq.s32.totalorder %s29, 3
      %p293 = por %p291, %p292
      %p294 = scmp.ne.s32.totalorder %s283, %s284
      %p295 = scmp.eq.s32.totalorder %s29, 0
      %p296 = por %p294, %p295
      %p297 = scmp.ne.s32.totalorder %s283, %s284
      %p298 = scmp.eq.s32.totalorder %s30, 3
      %p299 = por %p297, %p298
      %p301 = scmp.ne.s32.totalorder %s284, %s300
      %p302 = scmp.eq.s32.totalorder %s30, 0
      %p303 = por %p301, %p302
      %s304 = ssub.s32 %s32, %s39
      %p305 = scmp.eq.s32.totalorder %s304, 0
      %s307 = sadd.s32 %s306, 1
      %s308 = scalar_select %p305, %s306, %s307
      %p311 = pneg %p305
      %p312 = scmp.eq.s32.totalorder %s24, 3
      %p313 = por %p311, %p312
      %p314 = scmp.ne.s32.totalorder %s306, %s309
      %p315 = scmp.eq.s32.totalorder %s24, 0
      %p316 = por %p314, %p315
      %p317 = scmp.ne.s32.totalorder %s306, %s309
      %p318 = scmp.eq.s32.totalorder %s29, 3
      %p319 = por %p317, %p318
      %p320 = scmp.ne.s32.totalorder %s309, %s310
      %p321 = scmp.eq.s32.totalorder %s29, 0
      %p322 = por %p320, %p321
      %p323 = scmp.ne.s32.totalorder %s309, %s310
      %p324 = scmp.eq.s32.totalorder %s30, 3
      %p325 = por %p323, %p324
      %p327 = scmp.ne.s32.totalorder %s310, %s326
      %p328 = scmp.eq.s32.totalorder %s30, 0
      %p329 = por %p327, %p328
      %s330 = ssub.s32 %s32, %s39
      %p331 = scmp.eq.s32.totalorder %s330, 0
      %s333 = sadd.s32 %s332, 1
      %s334 = scalar_select %p331, %s332, %s333
      %p337 = pneg %p331
      %p338 = scmp.eq.s32.totalorder %s24, 3
      %p339 = por %p337, %p338
      %p340 = scmp.ne.s32.totalorder %s332, %s335
      %p341 = scmp.eq.s32.totalorder %s24, 0
      %p342 = por %p340, %p341
      %p343 = scmp.ne.s32.totalorder %s332, %s335
      %p344 = scmp.eq.s32.totalorder %s29, 3
      %p345 = por %p343, %p344
      %p346 = scmp.ne.s32.totalorder %s335, %s336
      %p347 = scmp.eq.s32.totalorder %s29, 0
      %p348 = por %p346, %p347
      %p349 = scmp.ne.s32.totalorder %s335, %s336
      %p350 = scmp.eq.s32.totalorder %s30, 3
      %p351 = por %p349, %p350
      %p353 = scmp.ne.s32.totalorder %s336, %s352
      %p354 = scmp.eq.s32.totalorder %s30, 0
      %p355 = por %p353, %p354
      %s356 = ssub.s32 %s32, %s39
      %p357 = scmp.eq.s32.totalorder %s356, 0
      %s359 = sadd.s32 %s358, 1
      %s360 = scalar_select %p357, %s358, %s359
      %p363 = pneg %p357
      %p364 = scmp.eq.s32.totalorder %s24, 3
      %p365 = por %p363, %p364
      %p366 = scmp.ne.s32.totalorder %s358, %s361
      %p367 = scmp.eq.s32.totalorder %s24, 0
      %p368 = por %p366, %p367
      %p369 = scmp.ne.s32.totalorder %s358, %s361
      %p370 = scmp.eq.s32.totalorder %s29, 3
      %p371 = por %p369, %p370
      %p372 = scmp.ne.s32.totalorder %s361, %s362
      %p373 = scmp.eq.s32.totalorder %s29, 0
      %p374 = por %p372, %p373
      %p375 = scmp.ne.s32.totalorder %s361, %s362
      %p376 = scmp.eq.s32.totalorder %s30, 3
      %p377 = por %p375, %p376
      %p379 = scmp.ne.s32.totalorder %s362, %s378
      %p380 = scmp.eq.s32.totalorder %s30, 0
      %p381 = por %p379, %p380
      %s383 = sadd.s32 %s382, 1
      %p386 = scmp.eq.s32.totalorder %s24, 3
      %p387 = scmp.ne.s32.totalorder %s382, %s384
      %p388 = scmp.eq.s32.totalorder %s24, 0
      %p389 = por %p387, %p388
      %p390 = scmp.ne.s32.totalorder %s382, %s384
      %p391 = scmp.eq.s32.totalorder %s29, 3
      %p392 = por %p390, %p391
      %p393 = scmp.ne.s32.totalorder %s384, %s385
      %p394 = scmp.eq.s32.totalorder %s29, 0
      %p395 = por %p393, %p394
      %p396 = scmp.ne.s32.totalorder %s384, %s385
      %p397 = scmp.eq.s32.totalorder %s30, 3
      %p398 = por %p396, %p397
      %p400 = scmp.ne.s32.totalorder %s385, %s399
      %p401 = scmp.eq.s32.totalorder %s30, 0
      %p402 = por %p400, %p401
      %s404 = sadd.s32 %s403, 1
      %p407 = scmp.eq.s32.totalorder %s24, 3
      %p408 = scmp.ne.s32.totalorder %s403, %s405
      %p409 = scmp.eq.s32.totalorder %s24, 0
      %p410 = por %p408, %p409
      %p411 = scmp.ne.s32.totalorder %s403, %s405
      %p412 = scmp.eq.s32.totalorder %s29, 3
      %p413 = por %p411, %p412
      %p414 = scmp.ne.s32.totalorder %s405, %s406
      %p415 = scmp.eq.s32.totalorder %s29, 0
      %p416 = por %p414, %p415
      %p417 = scmp.ne.s32.totalorder %s405, %s406
      %p418 = scmp.eq.s32.totalorder %s30, 3
      %p419 = por %p417, %p418
      %p421 = scmp.ne.s32.totalorder %s406, %s420
      %p422 = scmp.eq.s32.totalorder %s30, 0
      %p423 = por %p421, %p422
      %s424 = ssub.s32 %s31, %s43
      %p425 = scmp.eq.s32.totalorder %s424, 0
      %s427 = sadd.s32 %s426, 1
      %s428 = scalar_select %p425, %s426, %s427
      %p431 = pneg %p425
      %p432 = scmp.eq.s32.totalorder %s24, 3
      %p433 = por %p431, %p432
      %p434 = scmp.ne.s32.totalorder %s426, %s429
      %p435 = scmp.eq.s32.totalorder %s24, 0
      %p436 = por %p434, %p435
      %p437 = scmp.ne.s32.totalorder %s426, %s429
      %p438 = scmp.eq.s32.totalorder %s29, 3
      %p439 = por %p437, %p438
      %p440 = scmp.ne.s32.totalorder %s429, %s430
      %p441 = scmp.eq.s32.totalorder %s29, 0
      %p442 = por %p440, %p441
      %p443 = scmp.ne.s32.totalorder %s429, %s430
      %p444 = scmp.eq.s32.totalorder %s30, 3
      %p445 = por %p443, %p444
      %p447 = scmp.ne.s32.totalorder %s430, %s446
      %p448 = scmp.eq.s32.totalorder %s30, 0
      %p449 = por %p447, %p448
      %p450 = scmp.le.s32.totalorder 1, %s24
      %p451 = scmp.lt.s32.totalorder %s24, 5
      %p452 = pnand %p450, %p451
      %p453 = pneg %p452
      // Predicated region
      $region9: #{tpu_custom_call.1} parent=5 // pred_check
        _
      $region10: #{tpu_custom_call.1} parent=5 // pred_check_branch
        %455 = sbr.rel (%p452) target = $region12
      $region11: #{tpu_custom_call.1} parent=5 // pred_region
        %s456 = ssub.s32 %s24, 1
        // Predicated region
        $region13: #{tpu_custom_call.1} parent=11 // pred_check
          %p457 = pneg %p395
        $region14: #{tpu_custom_call.1} parent=11 // pred_check_branch
          %459 = sbr.rel (%p457) target = $region16
        $region15: #{tpu_custom_call.1} parent=11 // pred_region
          _
        $region16: #{tpu_custom_call.1} parent=11 // pred_fallthru
          _
        // Predicated region
        $region17: #{tpu_custom_call.1} parent=11 // pred_check
          %p460 = pneg %p416
        $region18: #{tpu_custom_call.1} parent=11 // pred_check_branch
          %462 = sbr.rel (%p460) target = $region20
        $region19: #{tpu_custom_call.1} parent=11 // pred_region
          _
        $region20: #{tpu_custom_call.1} parent=11 // pred_fallthru
          _
      $region12: #{tpu_custom_call.1} parent=5 // pred_fallthru
        _
      %p463 = scmp.lt.s32.totalorder %s24, 4
      // Predicated region
      $region21: #{tpu_custom_call.1} parent=5 // pred_check
        %p464 = pneg %p463
      $region22: #{tpu_custom_call.1} parent=5 // pred_check_branch
        %466 = sbr.rel (%p464) target = $region24
      $region23: #{tpu_custom_call.1} parent=5 // pred_region
        // Predicated region
        $region25: #{tpu_custom_call.1} parent=23 // pred_check
          %p467 = pneg %p56
        $region26: #{tpu_custom_call.1} parent=23 // pred_check_branch
          %469 = sbr.rel (%p467) target = $region28
        $region27: #{tpu_custom_call.1} parent=23 // pred_region
          %p470 = scmp.lt.s32.totalorder %s31, 1
          %s471 = scalar_select %p470, %s31, 1
          %s472 = smul.addr %s471, 8
          %s473 = scalar_lea.vmem %s0, %s472
        $region28: #{tpu_custom_call.1} parent=23 // pred_fallthru
          _
        // Predicated region
        $region29: #{tpu_custom_call.1} parent=23 // pred_check
          %p474 = pneg %p82
        $region30: #{tpu_custom_call.1} parent=23 // pred_check_branch
          %476 = sbr.rel (%p474) target = $region32
        $region31: #{tpu_custom_call.1} parent=23 // pred_region
          %p477 = scmp.lt.s32.totalorder %s32, 1
          %s478 = scalar_select %p477, %s32, 1
          %s479 = smul.addr %s478, 4
          %s480 = smul.addr %s479, 4
          %s481 = scalar_lea.vmem %s1, %s480
        $region32: #{tpu_custom_call.1} parent=23 // pred_fallthru
          _
        // Predicated region
        $region33: #{tpu_custom_call.1} parent=23 // pred_check
          %p482 = pneg %p108
        $region34: #{tpu_custom_call.1} parent=23 // pred_check_branch
          %484 = sbr.rel (%p482) target = $region36
        $region35: #{tpu_custom_call.1} parent=23 // pred_region
          %p485 = scmp.lt.s32.totalorder %s32, 1
          %s486 = scalar_select %p485, %s32, 1
          %s487 = scalar_lea.vmem %s2, %s486
        $region36: #{tpu_custom_call.1} parent=23 // pred_fallthru
          _
        // Predicated region
        $region37: #{tpu_custom_call.1} parent=23 // pred_check
          %p488 = pneg %p134
        $region38: #{tpu_custom_call.1} parent=23 // pred_check_branch
          %490 = sbr.rel (%p488) target = $region40
        $region39: #{tpu_custom_call.1} parent=23 // pred_region
          %p491 = scmp.lt.s32.totalorder %s32, 1
          %s492 = scalar_select %p491, %s32, 1
          %s493 = smul.addr %s492, 4
          %s494 = smul.addr %s493, 4
          %s495 = scalar_lea.vmem %s3, %s494
        $region40: #{tpu_custom_call.1} parent=23 // pred_fallthru
          _
        // Predicated region
        $region41: #{tpu_custom_call.1} parent=23 // pred_check
          %p496 = pneg %p160
        $region42: #{tpu_custom_call.1} parent=23 // pred_check_branch
          %498 = sbr.rel (%p496) target = $region44
        $region43: #{tpu_custom_call.1} parent=23 // pred_region
          %p499 = scmp.lt.s32.totalorder %s32, 1
          %s500 = scalar_select %p499, %s32, 1
          %s501 = scalar_lea.vmem %s4, %s500
        $region44: #{tpu_custom_call.1} parent=23 // pred_fallthru
          _
        // Predicated region
        $region45: #{tpu_custom_call.1} parent=23 // pred_check
          %p502 = pneg %p186
        $region46: #{tpu_custom_call.1} parent=23 // pred_check_branch
          %504 = sbr.rel (%p502) target = $region48
        $region47: #{tpu_custom_call.1} parent=23 // pred_region
          %p505 = scmp.lt.s32.totalorder %s32, 1
          %s506 = scalar_select %p505, %s32, 1
          %s507 = scalar_lea.vmem %s5, %s506
        $region48: #{tpu_custom_call.1} parent=23 // pred_fallthru
          _
        // Predicated region
        $region49: #{tpu_custom_call.1} parent=23 // pred_check
          %p508 = pneg %p212
        $region50: #{tpu_custom_call.1} parent=23 // pred_check_branch
          %510 = sbr.rel (%p508) target = $region52
        $region51: #{tpu_custom_call.1} parent=23 // pred_region
          %p511 = scmp.lt.s32.totalorder %s32, 1
          %s512 = scalar_select %p511, %s32, 1
          %s513 = scalar_lea.vmem %s6, %s512
        $region52: #{tpu_custom_call.1} parent=23 // pred_fallthru
          _
        // Predicated region
        $region53: #{tpu_custom_call.1} parent=23 // pred_check
          %p514 = pneg %p238
        $region54: #{tpu_custom_call.1} parent=23 // pred_check_branch
          %516 = sbr.rel (%p514) target = $region56
        $region55: #{tpu_custom_call.1} parent=23 // pred_region
          %p517 = scmp.lt.s32.totalorder %s32, 1
          %s518 = scalar_select %p517, %s32, 1
          %s519 = scalar_lea.vmem %s7, %s518
        $region56: #{tpu_custom_call.1} parent=23 // pred_fallthru
          _
        // Predicated region
        $region57: #{tpu_custom_call.1} parent=23 // pred_check
          %p520 = pneg %p264
        $region58: #{tpu_custom_call.1} parent=23 // pred_check_branch
          %522 = sbr.rel (%p520) target = $region60
        $region59: #{tpu_custom_call.1} parent=23 // pred_region
          %p523 = scmp.lt.s32.totalorder %s32, 1
          %s524 = scalar_select %p523, %s32, 1
          %s525 = scalar_lea.vmem %s8, %s524
        $region60: #{tpu_custom_call.1} parent=23 // pred_fallthru
          _
        // Predicated region
        $region61: #{tpu_custom_call.1} parent=23 // pred_check
          %p526 = pneg %p290
        $region62: #{tpu_custom_call.1} parent=23 // pred_check_branch
          %528 = sbr.rel (%p526) target = $region64
        $region63: #{tpu_custom_call.1} parent=23 // pred_region
          %p529 = scmp.lt.s32.totalorder %s32, 1
          %s530 = scalar_select %p529, %s32, 1
          %s531 = smul.addr %s530, 4
          %s532 = smul.addr %s531, 4
          %s533 = scalar_lea.vmem %s9, %s532
        $region64: #{tpu_custom_call.1} parent=23 // pred_fallthru
          _
        // Predicated region
        $region65: #{tpu_custom_call.1} parent=23 // pred_check
          %p534 = pneg %p316
        $region66: #{tpu_custom_call.1} parent=23 // pred_check_branch
          %536 = sbr.rel (%p534) target = $region68
        $region67: #{tpu_custom_call.1} parent=23 // pred_region
          %p537 = scmp.lt.s32.totalorder %s32, 1
          %s538 = scalar_select %p537, %s32, 1
          %s539 = scalar_lea.vmem %s10, %s538
        $region68: #{tpu_custom_call.1} parent=23 // pred_fallthru
          _
        // Predicated region
        $region69: #{tpu_custom_call.1} parent=23 // pred_check
          %p540 = pneg %p342
        $region70: #{tpu_custom_call.1} parent=23 // pred_check_branch
          %542 = sbr.rel (%p540) target = $region72
        $region71: #{tpu_custom_call.1} parent=23 // pred_region
          %p543 = scmp.lt.s32.totalorder %s32, 1
          %s544 = scalar_select %p543, %s32, 1
          %s545 = smul.addr %s544, 16
          %s546 = smul.addr %s545, 4
          %s547 = scalar_lea.vmem %s11, %s546
        $region72: #{tpu_custom_call.1} parent=23 // pred_fallthru
          _
        // Predicated region
        $region73: #{tpu_custom_call.1} parent=23 // pred_check
          %p548 = pneg %p368
        $region74: #{tpu_custom_call.1} parent=23 // pred_check_branch
          %550 = sbr.rel (%p548) target = $region76
        $region75: #{tpu_custom_call.1} parent=23 // pred_region
          %p551 = scmp.lt.s32.totalorder %s32, 1
          %s552 = scalar_select %p551, %s32, 1
          %s553 = scalar_lea.vmem %s12, %s552
        $region76: #{tpu_custom_call.1} parent=23 // pred_fallthru
          _
      $region24: #{tpu_custom_call.1} parent=5 // pred_fallthru
        _
      %p554 = scmp.le.s32.totalorder 1, %s24
      %p555 = scmp.lt.s32.totalorder %s24, 5
      %p556 = pnand %p554, %p555
      %p557 = pneg %p556
      // Predicated region
      $region77: #{tpu_custom_call.1} parent=5 // pred_check
        _
      $region78: #{tpu_custom_call.1} parent=5 // pred_check_branch
        %559 = sbr.rel (%p556) target = $region80
      $region79: #{tpu_custom_call.1} parent=5 // pred_region
        %s560 = ssub.s32 %s24, 1
        %p561 = scmp.lt.s32.totalorder %s33, 1
        %s562 = scalar_select %p561, %s33, 1
        %s563 = smul.addr %s562, 8
        %s564 = scalar_lea.vmem %s0, %s563
        %p565 = pneg %p62
        %p566 = pneg %p59
        %p567 = scmp.lt.s32.totalorder %s34, 1
        %s568 = scalar_select %p567, %s34, 1
        %s569 = smul.addr %s568, 4
        %s570 = smul.addr %s569, 4
        %s571 = scalar_lea.vmem %s1, %s570
        %p572 = pneg %p88
        %p573 = pneg %p85
        %p574 = scmp.lt.s32.totalorder %s34, 1
        %s575 = scalar_select %p574, %s34, 1
        %s576 = scalar_lea.vmem %s2, %s575
        %p577 = pneg %p114
        %p578 = pneg %p111
        %p579 = scmp.lt.s32.totalorder %s34, 1
        %s580 = scalar_select %p579, %s34, 1
        %s581 = smul.addr %s580, 4
        %s582 = smul.addr %s581, 4
        %s583 = scalar_lea.vmem %s3, %s582
        %p584 = pneg %p140
        %p585 = pneg %p137
        %p586 = scmp.lt.s32.totalorder %s34, 1
        %s587 = scalar_select %p586, %s34, 1
        %s588 = scalar_lea.vmem %s4, %s587
        %p589 = pneg %p166
        %p590 = pneg %p163
        %p591 = scmp.lt.s32.totalorder %s34, 1
        %s592 = scalar_select %p591, %s34, 1
        %s593 = scalar_lea.vmem %s5, %s592
        %p594 = pneg %p192
        %p595 = pneg %p189
        %p596 = scmp.lt.s32.totalorder %s34, 1
        %s597 = scalar_select %p596, %s34, 1
        %s598 = scalar_lea.vmem %s6, %s597
        %p599 = pneg %p218
        %p600 = pneg %p215
        %p601 = scmp.lt.s32.totalorder %s34, 1
        %s602 = scalar_select %p601, %s34, 1
        %s603 = scalar_lea.vmem %s7, %s602
        %p604 = pneg %p244
        %p605 = pneg %p241
        %p606 = scmp.lt.s32.totalorder %s34, 1
        %s607 = scalar_select %p606, %s34, 1
        %s608 = scalar_lea.vmem %s8, %s607
        %p609 = pneg %p270
        %p610 = pneg %p267
        %p611 = scmp.lt.s32.totalorder %s34, 1
        %s612 = scalar_select %p611, %s34, 1
        %s613 = smul.addr %s612, 4
        %s614 = smul.addr %s613, 4
        %s615 = scalar_lea.vmem %s9, %s614
        %p616 = pneg %p296
        %p617 = pneg %p293
        %p618 = scmp.lt.s32.totalorder %s34, 1
        %s619 = scalar_select %p618, %s34, 1
        %s620 = scalar_lea.vmem %s10, %s619
        %p621 = pneg %p322
        %p622 = pneg %p319
        %p623 = scmp.lt.s32.totalorder %s34, 1
        %s624 = scalar_select %p623, %s34, 1
        %s625 = smul.addr %s624, 16
        %s626 = smul.addr %s625, 4
        %s627 = scalar_lea.vmem %s11, %s626
        %p628 = pneg %p348
        %p629 = pneg %p345
        %p630 = scmp.lt.s32.totalorder %s34, 1
        %s631 = scalar_select %p630, %s34, 1
        %s632 = scalar_lea.vmem %s12, %s631
        %p633 = pneg %p374
        %p634 = pneg %p371
        %p635 = pneg %p395
        %p636 = pneg %p392
        %p637 = pneg %p416
        %p638 = pneg %p413
        %p639 = pneg %p442
        %p640 = pneg %p439
        %s641 = sand.u32 %s429, 1
        %s642 = scalar_lea.sflag [#allocation4], %s641
        %s643 = sand.u32 %s429, 1
        %s644 = smul.addr %s643, 8
        %s645 = scalar_lea.vmem [#allocation3], %s644
        %p646 = scmp.lt.s32.totalorder %s33, 1
        %s647 = scalar_select %p646, %s33, 1
        %s648 = smul.addr %s647, 8
        %s649 = scalar_lea.vmem %s0, %s648
        %p650 = scmp.lt.s32.totalorder %s34, 1
        %s651 = scalar_select %p650, %s34, 1
        %s652 = smul.addr %s651, 4
        %s653 = smul.addr %s652, 4
        %s654 = scalar_lea.vmem %s1, %s653
        %p655 = scmp.lt.s32.totalorder %s34, 1
        %s656 = scalar_select %p655, %s34, 1
        %s657 = scalar_lea.vmem %s2, %s656
        %p658 = scmp.lt.s32.totalorder %s34, 1
        %s659 = scalar_select %p658, %s34, 1
        %s660 = smul.addr %s659, 4
        %s661 = smul.addr %s660, 4
        %s662 = scalar_lea.vmem %s3, %s661
        %p663 = scmp.lt.s32.totalorder %s34, 1
        %s664 = scalar_select %p663, %s34, 1
        %s665 = scalar_lea.vmem %s4, %s664
        %p666 = scmp.lt.s32.totalorder %s34, 1
        %s667 = scalar_select %p666, %s34, 1
        %s668 = scalar_lea.vmem %s5, %s667
        %p669 = scmp.lt.s32.totalorder %s34, 1
        %s670 = scalar_select %p669, %s34, 1
        %s671 = scalar_lea.vmem %s6, %s670
        %p672 = scmp.lt.s32.totalorder %s34, 1
        %s673 = scalar_select %p672, %s34, 1
        %s674 = scalar_lea.vmem %s7, %s673
        %p675 = scmp.lt.s32.totalorder %s34, 1
        %s676 = scalar_select %p675, %s34, 1
        %s677 = scalar_lea.vmem %s8, %s676
        %p678 = scmp.lt.s32.totalorder %s34, 1
        %s679 = scalar_select %p678, %s34, 1
        %s680 = smul.addr %s679, 4
        %s681 = smul.addr %s680, 4
        %s682 = scalar_lea.vmem %s9, %s681
        %p683 = scmp.lt.s32.totalorder %s34, 1
        %s684 = scalar_select %p683, %s34, 1
        %s685 = scalar_lea.vmem %s10, %s684
        %p686 = scmp.lt.s32.totalorder %s34, 1
        %s687 = scalar_select %p686, %s34, 1
        %s688 = smul.addr %s687, 16
        %s689 = smul.addr %s688, 4
        %s690 = scalar_lea.vmem %s11, %s689
        %p691 = scmp.lt.s32.totalorder %s34, 1
        %s692 = scalar_select %p691, %s34, 1
        %s693 = scalar_lea.vmem %s12, %s692
        %p695 = scmp.eq.s32.totalorder %s34, 0
        // Predicated region
        $region81: #{tpu_custom_call.1} parent=79 // pred_check
          %p696 = pneg %p695
        $region82: #{tpu_custom_call.1} parent=79 // pred_check_branch
          %698 = sbr.rel (%p696) target = $region84
        $region83: #{tpu_custom_call.1} parent=79 // pred_region
          %v699 = vld [vmem:[%s649] sm:$0xff]
          %vm700 = vcmask 261120
          %701 = vst.msk [vmem:[#allocation2] sm:$0xff] %vm700, %v699
        $region84: #{tpu_custom_call.1} parent=79 // pred_fallthru
          _
        %v702 = vlaneseq
        %v703 = vshrl.u32 %v702, 7
        %v704 = vlaneseq
        %v705 = vand.u32 %v704, 127
        %vm706 = vcmp.ge.s32.totalorder %v703, %v705
        %v707 = vsel %vm706, 0.0, -1e+30
        %v708 = vld [vmem:[#allocation2] sm:$0xff]
        %v709 = vld [vmem:[%s668] sm:$0x1]
        %v710 = vld [vmem:[%s671] sm:$0x1]
        %vm711 = vcmask 261120
        %v712 = vsel %vm711, %v708, 0.0
        %713 = vadd.xlane.f32.xlu0 %v712
        %v714 = vpop.xlane.xlu0 %713
        %v715 = vrcp.pop 32.0
        %v716 = vmul.f32 32.0, %v715
        %v717 = vsub.f32 1.0, %v716
        %v718 = vmul.f32 %v715, %v717
        %v719 = vadd.f32 %v715, %v718
        %vm720 = vweird.f32 %v715
        %v721 = vsel %vm720, %v715, %v719
        %v722 = vmul.f32 %v714, %v721
        %v723 = vsub.f32 %v708, %v722
        %v724 = vmul.f32 %v723, %v723
        %v725 = vsel %vm711, %v724, 0.0
        %726 = vadd.xlane.f32.xlu0 %v725
        %v727 = vpop.xlane.xlu0 %726
        %v728 = vmul.f32 %v727, %v721
        %v729 = vadd.f32 %v728, 1e-05
        %v730 = vrsqrt.pop %v729
        %v731 = vmul.f32 %v730, %v729
        %v732 = vmul.f32 %v731, %v730
        %v733 = vmul.f32 0.5, %v732
        %v734 = vsub.f32 1.5, %v733
        %v735 = vmul.f32 %v730, %v734
        %vm736 = vweird.f32 %v729
        %vm737 = vweird.f32 %v730
        %vm738 = vmor %vm736, %vm737
        %v739 = vsel %vm738, %v730, %v735
        %v740 = vmul.f32 %v723, %v739
        %v742 = vperm.slane %v709, 0
        %v744 = vmul.f32 %v740, %v742
        %v746 = vperm.slane %v710, 0
        %v748 = vadd.f32 %v744, %v746
        %v749 = vpack.c.bf16 %v748, %v748
        %v750 = vld [vmem:[%s654] sm:$0xf]
        %v751 = vld [vmem:[%s654 + $0x4] sm:$0xf]
        %v752 = vld [vmem:[%s654 + $0x8] sm:$0xf]
        %v753 = vld [vmem:[%s654 + $0xc] sm:$0xf]
        %v754 = vld [vmem:[%s657] sm:$0x1]
        %v756 = vperm.slane %v754, 0
        %v762 = vunpack.c.l.b16 %v750
        %v763 = vunpack.c.l.b16 %v751
        %v764 = vunpack.c.l.b16 %v752
        %v765 = vunpack.c.l.b16 %v753
        %v766 = vpack.c.b16 %v763, %v762
        %v767 = vpack.c.b16 %v765, %v764
        %v771 = vsel %vm711, %v749, 0
        %773 = vmatpush.bf16.msra.mxu0 0
        %774 = vmatpush.bf16.msra.mxu0 0
        %775 = vmatpush.bf16.msra.mxu0 0
        %776 = vmatpush.bf16.msra.mxu0 0
        %777 = vmatpush.bf16.msra.mxu0 0
        %778 = vmatpush.bf16.msra.mxu0 0
        %779 = vmatpush.bf16.msra.mxu0 %v767
        %780 = vmatpush.bf16.msra.mxu0 %v766
        %781 = vmatmul.bf16.gmra.mxu0 %v771
        %v782 = vpop.f32.mrf.mxu0
        %v783 = vadd.f32 %v756, %v782
        %v784 = vpop.f32.mrf.mxu0
        %785 = vdwg.mxu0
        %v786 = vpack.c.bf16 %v783, %v783
        %v788 = vunpack.c.l.b16 %v786
        %v789 = vpack.c.b16 %v788, %v788
        %790 = vrot.lane.b32.xlu0 %v789, 96
        %v791 = vpop.permute.xlu0 %790
        %vm792 = vcmask 64512
        %v794 = vsel %vm792, %v786, 0
        %v797 = vsel %vm792, %v791, 0
        %799 = vmatpush.bf16.xpose.msra.mxu0 0
        %800 = vmatpush.bf16.xpose.msra.mxu0 0
        %801 = vmatpush.bf16.xpose.msra.mxu0 0
        %802 = vmatpush.bf16.xpose.msra.mxu0 0
        %803 = vmatpush.bf16.xpose.msra.mxu0 0
        %804 = vmatpush.bf16.xpose.msra.mxu0 0
        %805 = vmatpush.bf16.xpose.msra.mxu0 0
        %806 = vmatpush.bf16.xpose.msra.mxu0 %v797
        %807 = vmatmul.bf16.gmra.mxu0 %v794
        %v808 = vpop.f32.mrf.mxu0
        %v809 = vadd.f32 0.0, %v808
        %v810 = vpop.f32.mrf.mxu0
        %811 = vdwg.mxu0
        %v812 = vmul.f32 %v809, 0.35355338
        %v813 = vadd.f32 %v812, %v707
        %v814 = vsel %vm792, %v813, -inf
        %815 = vmax.xlane.f32.xlu0 %v814
        %v816 = vpop.xlane.xlu0 %815
        %v817 = vsub.f32 %v813, %v816
        %v818 = vmul.f32 %v817, 1.442695
        %v819 = vpow.pop %v818
        %v820 = vsel %vm792, %v819, 0.0
        %821 = vadd.xlane.f32.xlu0 %v820
        %v822 = vpop.xlane.xlu0 %821
        %v823 = vrcp.pop %v822
        %v824 = vmul.f32 %v819, %v823
        %v825 = vpack.c.bf16 %v824, %v824
        %826 = vrot.lane.b32.xlu0 %v789, 64
        %v827 = vpop.permute.xlu0 %826
        %v829 = vsel %vm792, %v825, 0
        %vm831 = vcmask 1043456
        %v833 = vsel %vm831, %v827, 0
        %835 = vmatpush.bf16.msra.mxu0 0
        %836 = vmatpush.bf16.msra.mxu0 0
        %837 = vmatpush.bf16.msra.mxu0 0
        %838 = vmatpush.bf16.msra.mxu0 0
        %839 = vmatpush.bf16.msra.mxu0 0
        %840 = vmatpush.bf16.msra.mxu0 0
        %841 = vmatpush.bf16.msra.mxu0 0
        %842 = vmatpush.bf16.msra.mxu0 %v833
        %843 = vmatmul.bf16.gmra.mxu0 %v829
        %v844 = vpop.f32.mrf.mxu0
        %v845 = vadd.f32 0.0, %v844
        %v846 = vpop.f32.mrf.mxu0
        %847 = vdwg.mxu0
        %848 = vrot.lane.b32.xlu0 %v789, 120
        %v849 = vpop.permute.xlu0 %848
        %850 = vrot.lane.b32.xlu0 %v789, 88
        %v851 = vpop.permute.xlu0 %850
        %v853 = vsel %vm792, %v849, 0
        %v856 = vsel %vm792, %v851, 0
        %858 = vmatpush.bf16.xpose.msra.mxu0 0
        %859 = vmatpush.bf16.xpose.msra.mxu0 0
        %860 = vmatpush.bf16.xpose.msra.mxu0 0
        %861 = vmatpush.bf16.xpose.msra.mxu0 0
        %862 = vmatpush.bf16.xpose.msra.mxu0 0
        %863 = vmatpush.bf16.xpose.msra.mxu0 0
        %864 = vmatpush.bf16.xpose.msra.mxu0 0
        %865 = vmatpush.bf16.xpose.msra.mxu0 %v856
        %866 = vmatmul.bf16.gmra.mxu0 %v853
        %v867 = vpop.f32.mrf.mxu0
        %v868 = vadd.f32 0.0, %v867
        %v869 = vpop.f32.mrf.mxu0
        %870 = vdwg.mxu0
        %v871 = vmul.f32 %v868, 0.35355338
        %v872 = vadd.f32 %v871, %v707
        %v873 = vsel %vm792, %v872, -inf
        %874 = vmax.xlane.f32.xlu0 %v873
        %v875 = vpop.xlane.xlu0 %874
        %v876 = vsub.f32 %v872, %v875
        %v877 = vmul.f32 %v876, 1.442695
        %v878 = vpow.pop %v877
        %v879 = vsel %vm792, %v878, 0.0
        %880 = vadd.xlane.f32.xlu0 %v879
        %v881 = vpop.xlane.xlu0 %880
        %v882 = vrcp.pop %v881
        %v883 = vmul.f32 %v878, %v882
        %v884 = vpack.c.bf16 %v883, %v883
        %885 = vrot.lane.b32.xlu0 %v789, 56
        %v886 = vpop.permute.xlu0 %885
        %v888 = vsel %vm792, %v884, 0
        %v891 = vsel %vm831, %v886, 0
        %893 = vmatpush.bf16.msra.mxu0 0
        %894 = vmatpush.bf16.msra.mxu0 0
        %895 = vmatpush.bf16.msra.mxu0 0
        %896 = vmatpush.bf16.msra.mxu0 0
        %897 = vmatpush.bf16.msra.mxu0 0
        %898 = vmatpush.bf16.msra.mxu0 0
        %899 = vmatpush.bf16.msra.mxu0 0
        %900 = vmatpush.bf16.msra.mxu0 %v891
        %901 = vmatmul.bf16.gmra.mxu0 %v888
        %v902 = vpop.f32.mrf.mxu0
        %v903 = vadd.f32 0.0, %v902
        %v904 = vpop.f32.mrf.mxu0
        %905 = vdwg.mxu0
        %906 = vrot.lane.b32.xlu0 %v789, 112
        %v907 = vpop.permute.xlu0 %906
        %908 = vrot.lane.b32.xlu0 %v789, 80
        %v909 = vpop.permute.xlu0 %908
        %v911 = vsel %vm792, %v907, 0
        %v914 = vsel %vm792, %v909, 0
        %916 = vmatpush.bf16.xpose.msra.mxu0 0
        %917 = vmatpush.bf16.xpose.msra.mxu0 0
        %918 = vmatpush.bf16.xpose.msra.mxu0 0
        %919 = vmatpush.bf16.xpose.msra.mxu0 0
        %920 = vmatpush.bf16.xpose.msra.mxu0 0
        %921 = vmatpush.bf16.xpose.msra.mxu0 0
        %922 = vmatpush.bf16.xpose.msra.mxu0 0
        %923 = vmatpush.bf16.xpose.msra.mxu0 %v914
        %924 = vmatmul.bf16.gmra.mxu0 %v911
        %v925 = vpop.f32.mrf.mxu0
        %v926 = vadd.f32 0.0, %v925
        %v927 = vpop.f32.mrf.mxu0
        %928 = vdwg.mxu0
        %v929 = vmul.f32 %v926, 0.35355338
        %v930 = vadd.f32 %v929, %v707
        %v931 = vsel %vm792, %v930, -inf
        %932 = vmax.xlane.f32.xlu0 %v931
        %v933 = vpop.xlane.xlu0 %932
        %v934 = vsub.f32 %v930, %v933
        %v935 = vmul.f32 %v934, 1.442695
        %v936 = vpow.pop %v935
        %v937 = vsel %vm792, %v936, 0.0
        %938 = vadd.xlane.f32.xlu0 %v937
        %v939 = vpop.xlane.xlu0 %938
        %v940 = vrcp.pop %v939
        %v941 = vmul.f32 %v936, %v940
        %v942 = vpack.c.bf16 %v941, %v941
        %943 = vrot.lane.b32.xlu0 %v789, 48
        %v944 = vpop.permute.xlu0 %943
        %v946 = vsel %vm792, %v942, 0
        %v949 = vsel %vm831, %v944, 0
        %951 = vmatpush.bf16.msra.mxu0 0
        %952 = vmatpush.bf16.msra.mxu0 0
        %953 = vmatpush.bf16.msra.mxu0 0
        %954 = vmatpush.bf16.msra.mxu0 0
        %955 = vmatpush.bf16.msra.mxu0 0
        %956 = vmatpush.bf16.msra.mxu0 0
        %957 = vmatpush.bf16.msra.mxu0 0
        %958 = vmatpush.bf16.msra.mxu0 %v949
        %959 = vmatmul.bf16.gmra.mxu0 %v946
        %v960 = vpop.f32.mrf.mxu0
        %v961 = vadd.f32 0.0, %v960
        %v962 = vpop.f32.mrf.mxu0
        %963 = vdwg.mxu0
        %964 = vrot.lane.b32.xlu0 %v789, 104
        %v965 = vpop.permute.xlu0 %964
        %966 = vrot.lane.b32.xlu0 %v789, 72
        %v967 = vpop.permute.xlu0 %966
        %v969 = vsel %vm792, %v965, 0
        %v972 = vsel %vm792, %v967, 0
        %974 = vmatpush.bf16.xpose.msra.mxu0 0
        %975 = vmatpush.bf16.xpose.msra.mxu0 0
        %976 = vmatpush.bf16.xpose.msra.mxu0 0
        %977 = vmatpush.bf16.xpose.msra.mxu0 0
        %978 = vmatpush.bf16.xpose.msra.mxu0 0
        %979 = vmatpush.bf16.xpose.msra.mxu0 0
        %980 = vmatpush.bf16.xpose.msra.mxu0 0
        %981 = vmatpush.bf16.xpose.msra.mxu0 %v972
        %982 = vmatmul.bf16.gmra.mxu0 %v969
        %v983 = vpop.f32.mrf.mxu0
        %v984 = vadd.f32 0.0, %v983
        %v985 = vpop.f32.mrf.mxu0
        %986 = vdwg.mxu0
        %v987 = vmul.f32 %v984, 0.35355338
        %v988 = vadd.f32 %v987, %v707
        %v989 = vsel %vm792, %v988, -inf
        %990 = vmax.xlane.f32.xlu0 %v989
        %v991 = vpop.xlane.xlu0 %990
        %v992 = vsub.f32 %v988, %v991
        %v993 = vmul.f32 %v992, 1.442695
        %v994 = vpow.pop %v993
        %v995 = vsel %vm792, %v994, 0.0
        %996 = vadd.xlane.f32.xlu0 %v995
        %v997 = vpop.xlane.xlu0 %996
        %v998 = vrcp.pop %v997
        %v999 = vmul.f32 %v994, %v998
        %v1000 = vpack.c.bf16 %v999, %v999
        %1001 = vrot.lane.b32.xlu0 %v789, 40
        %v1002 = vpop.permute.xlu0 %1001
        %v1004 = vsel %vm792, %v1000, 0
        %v1007 = vsel %vm831, %v1002, 0
        %1009 = vmatpush.bf16.msra.mxu0 0
        %1010 = vmatpush.bf16.msra.mxu0 0
        %1011 = vmatpush.bf16.msra.mxu0 0
        %1012 = vmatpush.bf16.msra.mxu0 0
        %1013 = vmatpush.bf16.msra.mxu0 0
        %1014 = vmatpush.bf16.msra.mxu0 0
        %1015 = vmatpush.bf16.msra.mxu0 0
        %1016 = vmatpush.bf16.msra.mxu0 %v1007
        %1017 = vmatmul.bf16.gmra.mxu0 %v1004
        %v1018 = vpop.f32.mrf.mxu0
        %v1019 = vadd.f32 0.0, %v1018
        %v1020 = vpop.f32.mrf.mxu0
        %1021 = vdwg.mxu0
        %1023 = vrot.lane.b32.xlu0 %v903, 8
        %v1024 = vpop.permute.xlu0 %1023
        %1027 = vrot.lane.b32.xlu0 %v961, 16
        %v1028 = vpop.permute.xlu0 %1027
        %1031 = vrot.lane.b32.xlu0 %v1019, 24
        %v1032 = vpop.permute.xlu0 %1031
        %v1034 = vsel %vm792, %v845, %v1024
        %vm1035 = vcmask 130048
        %v1036 = vsel %vm1035, %v1034, %v1028
        %vm1037 = vcmask 195584
        %v1038 = vsel %vm1037, %v1036, %v1032
        %v1039 = vpack.c.bf16 %v1038, %v1038
        %v1040 = vld [vmem:[%s662] sm:$0xf]
        %v1041 = vld [vmem:[%s662 + $0x4] sm:$0xf]
        %v1042 = vld [vmem:[%s662 + $0x8] sm:$0xf]
        %v1043 = vld [vmem:[%s662 + $0xc] sm:$0xf]
        %v1044 = vld [vmem:[%s665] sm:$0x1]
        %v1046 = vperm.slane %v1044, 0
        %v1052 = vunpack.c.l.b16 %v1040
        %v1053 = vunpack.c.l.b16 %v1041
        %v1054 = vunpack.c.l.b16 %v1042
        %v1055 = vunpack.c.l.b16 %v1043
        %v1056 = vpack.c.b16 %v1053, %v1052
        %v1057 = vpack.c.b16 %v1055, %v1054
        %v1061 = vsel %vm711, %v1039, 0
        %1063 = vmatpush.bf16.msra.mxu0 0
        %1064 = vmatpush.bf16.msra.mxu0 0
        %1065 = vmatpush.bf16.msra.mxu0 0
        %1066 = vmatpush.bf16.msra.mxu0 0
        %1067 = vmatpush.bf16.msra.mxu0 0
        %1068 = vmatpush.bf16.msra.mxu0 0
        %1069 = vmatpush.bf16.msra.mxu0 %v1057
        %1070 = vmatpush.bf16.msra.mxu0 %v1056
        %1071 = vmatmul.bf16.gmra.mxu0 %v1061
        %v1072 = vpop.f32.mrf.mxu0
        %v1073 = vadd.f32 %v1046, %v1072
        %v1074 = vpop.f32.mrf.mxu0
        %1075 = vdwg.mxu0
        %v1076 = vadd.f32 %v708, %v1073
        %v1077 = vld [vmem:[%s674] sm:$0x1]
        %v1078 = vld [vmem:[%s677] sm:$0x1]
        %v1079 = vsel %vm711, %v1076, 0.0
        %1080 = vadd.xlane.f32.xlu0 %v1079
        %v1081 = vpop.xlane.xlu0 %1080
        %v1082 = vmul.f32 %v1081, %v721
        %v1083 = vsub.f32 %v1076, %v1082
        %v1084 = vmul.f32 %v1083, %v1083
        %v1085 = vsel %vm711, %v1084, 0.0
        %1086 = vadd.xlane.f32.xlu0 %v1085
        %v1087 = vpop.xlane.xlu0 %1086
        %v1088 = vmul.f32 %v1087, %v721
        %v1089 = vadd.f32 %v1088, 1e-05
        %v1090 = vrsqrt.pop %v1089
        %v1091 = vmul.f32 %v1090, %v1089
        %v1092 = vmul.f32 %v1091, %v1090
        %v1093 = vmul.f32 0.5, %v1092
        %v1094 = vsub.f32 1.5, %v1093
        %v1095 = vmul.f32 %v1090, %v1094
        %vm1096 = vweird.f32 %v1089
        %vm1097 = vweird.f32 %v1090
        %vm1098 = vmor %vm1096, %vm1097
        %v1099 = vsel %vm1098, %v1090, %v1095
        %v1100 = vmul.f32 %v1083, %v1099
        %v1102 = vperm.slane %v1077, 0
        %v1104 = vmul.f32 %v1100, %v1102
        %v1106 = vperm.slane %v1078, 0
        %v1108 = vadd.f32 %v1104, %v1106
        %v1109 = vpack.c.bf16 %v1108, %v1108
        %v1110 = vld [vmem:[%s682] sm:$0xf]
        %v1111 = vld [vmem:[%s682 + $0x4] sm:$0xf]
        %v1112 = vld [vmem:[%s682 + $0x8] sm:$0xf]
        %v1113 = vld [vmem:[%s682 + $0xc] sm:$0xf]
        %v1114 = vld [vmem:[%s685] sm:$0x1]
        %v1116 = vperm.slane %v1114, 0
        %v1122 = vunpack.c.l.b16 %v1110
        %v1123 = vunpack.c.l.b16 %v1111
        %v1124 = vunpack.c.l.b16 %v1112
        %v1125 = vunpack.c.l.b16 %v1113
        %v1126 = vpack.c.b16 %v1123, %v1122
        %v1127 = vpack.c.b16 %v1125, %v1124
        %v1131 = vsel %vm711, %v1109, 0
        %1133 = vmatpush.bf16.msra.mxu0 0
        %1134 = vmatpush.bf16.msra.mxu0 0
        %1135 = vmatpush.bf16.msra.mxu0 0
        %1136 = vmatpush.bf16.msra.mxu0 0
        %1137 = vmatpush.bf16.msra.mxu0 0
        %1138 = vmatpush.bf16.msra.mxu0 0
        %1139 = vmatpush.bf16.msra.mxu0 %v1127
        %1140 = vmatpush.bf16.msra.mxu0 %v1126
        %1141 = vmatmul.bf16.gmra.mxu0 %v1131
        %v1142 = vpop.f32.mrf.mxu0
        %v1143 = vadd.f32 %v1116, %v1142
        %v1144 = vpop.f32.mrf.mxu0
        %1145 = vdwg.mxu0
        %v1146 = vmul.f32 %v1143, 0.5
        %v1147 = vmul.f32 %v1143, 0.044715
        %v1148 = vmul.f32 %v1147, %v1143
        %v1149 = vmul.f32 %v1148, %v1143
        %v1150 = vadd.f32 %v1143, %v1149
        %v1151 = vmul.f32 %v1150, 0.7978846
        %v1152 = vtanh.pop %v1151
        %v1153 = vadd.f32 %v1152, 1.0
        %v1154 = vmul.f32 %v1146, %v1153
        %v1155 = vpack.c.bf16 %v1154, %v1154
        %v1156 = vld [vmem:[%s690] sm:$0xf]
        %v1157 = vld [vmem:[%s690 + $0x4] sm:$0xf]
        %v1158 = vld [vmem:[%s690 + $0x8] sm:$0xf]
        %v1159 = vld [vmem:[%s690 + $0xc] sm:$0xf]
        %v1160 = vld [vmem:[%s690 + $0x10] sm:$0xf]
        %v1161 = vld [vmem:[%s690 + $0x14] sm:$0xf]
        %v1162 = vld [vmem:[%s690 + $0x18] sm:$0xf]
        %v1163 = vld [vmem:[%s690 + $0x1c] sm:$0xf]
        %v1164 = vld [vmem:[%s690 + $0x20] sm:$0xf]
        %v1165 = vld [vmem:[%s690 + $0x24] sm:$0xf]
        %v1166 = vld [vmem:[%s690 + $0x28] sm:$0xf]
        %v1167 = vld [vmem:[%s690 + $0x2c] sm:$0xf]
        %v1168 = vld [vmem:[%s690 + $0x30] sm:$0xf]
        %v1169 = vld [vmem:[%s690 + $0x34] sm:$0xf]
        %v1170 = vld [vmem:[%s690 + $0x38] sm:$0xf]
        %v1171 = vld [vmem:[%s690 + $0x3c] sm:$0xf]
        %v1188 = vunpack.c.l.b16 %v1156
        %v1189 = vunpack.c.l.b16 %v1157
        %v1190 = vunpack.c.l.b16 %v1158
        %v1191 = vunpack.c.l.b16 %v1159
        %v1192 = vunpack.c.l.b16 %v1160
        %v1193 = vunpack.c.l.b16 %v1161
        %v1194 = vunpack.c.l.b16 %v1162
        %v1195 = vunpack.c.l.b16 %v1163
        %v1196 = vunpack.c.l.b16 %v1164
        %v1197 = vunpack.c.l.b16 %v1165
        %v1198 = vunpack.c.l.b16 %v1166
        %v1199 = vunpack.c.l.b16 %v1167
        %v1200 = vunpack.c.l.b16 %v1168
        %v1201 = vunpack.c.l.b16 %v1169
        %v1202 = vunpack.c.l.b16 %v1170
        %v1203 = vunpack.c.l.b16 %v1171
        %v1204 = vpack.c.b16 %v1189, %v1188
        %v1205 = vpack.c.b16 %v1191, %v1190
        %v1206 = vpack.c.b16 %v1193, %v1192
        %v1207 = vpack.c.b16 %v1195, %v1194
        %v1208 = vpack.c.b16 %v1197, %v1196
        %v1209 = vpack.c.b16 %v1199, %v1198
        %v1210 = vpack.c.b16 %v1201, %v1200
        %v1211 = vpack.c.b16 %v1203, %v1202
        %1220 = vmatpush.bf16.msra.mxu0 %v1211
        %1221 = vmatpush.bf16.msra.mxu0 %v1210
        %1222 = vmatpush.bf16.msra.mxu0 %v1209
        %1223 = vmatpush.bf16.msra.mxu0 %v1208
        %1224 = vmatpush.bf16.msra.mxu0 %v1207
        %1225 = vmatpush.bf16.msra.mxu0 %v1206
        %1226 = vmatpush.bf16.msra.mxu0 %v1205
        %1227 = vmatpush.bf16.msra.mxu0 %v1204
        %1228 = vmatmul.bf16.gmra.mxu0 %v1155
        %v1229 = vpop.f32.mrf.mxu0
        %v1230 = vadd.f32 0.0, %v1229
        %v1231 = vpop.f32.mrf.mxu0
        %1232 = vdwg.mxu0
        %v1233 = vadd.f32 %v1076, %v1230
        %v1234 = vld [vmem:[%s693] sm:$0x1]
        %v1236 = vperm.slane %v1234, 0
        %v1238 = vadd.f32 %v1233, %v1236
        %1239 = vst.msk [vmem:[#allocation2] sm:$0xff] %vm711, %v1238
        %p1240 = scmp.eq.s32.totalorder %s34, 1
        // Predicated region
        $region85: #{tpu_custom_call.1} parent=79 // pred_check
          %p1241 = pneg %p1240
        $region86: #{tpu_custom_call.1} parent=79 // pred_check_branch
          %1243 = sbr.rel (%p1241) target = $region88
        $region87: #{tpu_custom_call.1} parent=79 // pred_region
          %v1244 = vld [vmem:[#allocation2] sm:$0xff]
          %v1245 = vld [vmem:[%s13] sm:$0x1]
          %v1246 = vld [vmem:[%s14] sm:$0x1]
          %v1247 = vsel %vm711, %v1244, 0.0
          %1248 = vadd.xlane.f32.xlu0 %v1247
          %v1249 = vpop.xlane.xlu0 %1248
          %v1250 = vmul.f32 %v1249, %v721
          %v1251 = vsub.f32 %v1244, %v1250
          %v1252 = vmul.f32 %v1251, %v1251
          %v1253 = vsel %vm711, %v1252, 0.0
          %1254 = vadd.xlane.f32.xlu0 %v1253
          %v1255 = vpop.xlane.xlu0 %1254
          %v1256 = vmul.f32 %v1255, %v721
          %v1257 = vadd.f32 %v1256, 1e-05
          %v1258 = vrsqrt.pop %v1257
          %v1259 = vmul.f32 %v1258, %v1257
          %v1260 = vmul.f32 %v1259, %v1258
          %v1261 = vmul.f32 0.5, %v1260
          %v1262 = vsub.f32 1.5, %v1261
          %v1263 = vmul.f32 %v1258, %v1262
          %vm1264 = vweird.f32 %v1257
          %vm1265 = vweird.f32 %v1258
          %vm1266 = vmor %vm1264, %vm1265
          %v1267 = vsel %vm1266, %v1258, %v1263
          %v1268 = vmul.f32 %v1251, %v1267
          %v1270 = vperm.slane %v1245, 0
          %v1272 = vmul.f32 %v1268, %v1270
          %v1274 = vperm.slane %v1246, 0
          %v1276 = vadd.f32 %v1272, %v1274
          %1277 = vst.msk [vmem:[%s645] sm:$0xff] %vm711, %v1276
        $region88: #{tpu_custom_call.1} parent=79 // pred_fallthru
          _
        %s1278 = sand.u32 %s429, 1
        %s1279 = scalar_lea.sflag [#allocation4], %s1278
        %s1280 = sand.u32 %s429, 1
        %s1281 = smul.addr %s1280, 8
        %s1282 = scalar_lea.vmem [#allocation3], %s1281
        // Predicated region
        $region89: #{tpu_custom_call.1} parent=79 // pred_check
          %p1283 = pneg %p439
        $region90: #{tpu_custom_call.1} parent=79 // pred_check_branch
          %1285 = sbr.rel (%p1283) target = $region92
        $region91: #{tpu_custom_call.1} parent=79 // pred_region
          %1287 = vsyncadd %s1279, 0
          %s1288 = smul.addr %s33, 8
          %s1289 = scalar_lea.hbm %s15, %s1288
          %s1291 = sshll.u32 %s1282, 4
          %s1292 = int_to_ptr.vmem [resolvable:$true] %s1291
          %s1293 = sshll.u32 %s1289, 4
          %s1294 = int_to_ptr.hbm [resolvable:$true] %s1293
          %1296 = dma.vmem_to_hbm [thread:$0]  %s1292, 128, %s1294, %s1279
        $region92: #{tpu_custom_call.1} parent=79 // pred_fallthru
          _
      $region80: #{tpu_custom_call.1} parent=5 // pred_fallthru
        _
      %p1297 = scmp.le.s32.totalorder 2, %s24
      // Predicated region
      $region93: #{tpu_custom_call.1} parent=5 // pred_check
        %p1298 = pneg %p1297
      $region94: #{tpu_custom_call.1} parent=5 // pred_check_branch
        %1300 = sbr.rel (%p1298) target = $region96
      $region95: #{tpu_custom_call.1} parent=5 // pred_region
        %s1301 = ssub.s32 %s24, 2
        // Predicated region
        $region97: #{tpu_custom_call.1} parent=95 // pred_check
          %p1302 = pneg %p445
        $region98: #{tpu_custom_call.1} parent=95 // pred_check_branch
          %1304 = sbr.rel (%p1302) target = $region100
        $region99: #{tpu_custom_call.1} parent=95 // pred_region
          %s1305 = sand.u32 %s430, 1
          %s1306 = scalar_lea.sflag [#allocation4], %s1305
          %s1307 = sand.u32 %s430, 1
          %s1308 = smul.addr %s1307, 8
          %s1309 = scalar_lea.vmem [#allocation3], %s1308
          %1311 = dma.done %s1306, 128
        $region100: #{tpu_custom_call.1} parent=95 // pred_fallthru
          _
      $region96: #{tpu_custom_call.1} parent=5 // pred_fallthru
        _
    $region6: #{tpu_custom_call.1} parent=1 // loop_footer
      %s28 = sadd.s32 1, %s24
    $region7: #{tpu_custom_call.1} parent=1 // loop_footer_branch
      %23 = sbr.rel target = $region3
    $region8: #{tpu_custom_call.1} parent=1 // loop_exit
      _
    %1312 = vsyncpa [#allocation4], 1
    %s1313 = scalar_lea.sflag [#allocation4], 1
    %1314 = vsyncpa %s1313, 1

</llo_original>
